<compile_context>
chip_gen: v6e
topology: v6e:2x2x1
jax: 0.10.0
libtpu: 0.0.40
codegen_flags: <defaults>
</compile_context>

<pallas_src>
import math

import jax
import jax.numpy as jnp
from jax import lax
from jax.experimental import pallas as pl
from jax.experimental.pallas import tpu as pltpu


# ----------------------------------------------------------------------------
# Fused Pallas kernel: all LSTM layers + final Linear in one launch
# ----------------------------------------------------------------------------
def _make_decoder_kernel(num_layers, seq_len, batch, hidden_size, f_pad):
    T, B, H = seq_len, batch, hidden_size
    bf16 = jnp.bfloat16

    def kernel(*refs):
        # ---- unpack refs (inputs, outputs, scratch) -------------------------
        x_ref = refs[0]                        # (T*B, Din0) bf16, time-major rows
        h0_ref = refs[1]                       # (L, B, H)   f32
        c0_ref = refs[2]                       # (L, B, H)   f32
        w_refs = refs[3:3 + 3 * num_layers]    # per layer: W_ih^T bf16, W_hh^T bf16, bias f32
        fc_w_ref = refs[3 + 3 * num_layers]    # (H, F_pad)  bf16 (zero padded)
        fc_b_ref = refs[4 + 3 * num_layers]    # (1, F_pad)  f32  (zero padded)
        pred_ref = refs[5 + 3 * num_layers]    # (T*B, F_pad) f32 out (lane dense)
        hN_ref = refs[6 + 3 * num_layers]      # (L, B, H)   f32 out
        cN_ref = refs[7 + 3 * num_layers]      # (L, B, H)   f32 out
        hid_ref = refs[8 + 3 * num_layers]     # (T*B, H)    f32 scratch (inter-layer acts)

        # Lane mask selecting the 'g' (tanh) gate among [i, f, g, o] columns.
        # Hoisted: built once, reused by every (layer, step).
        lane = lax.broadcasted_iota(jnp.int32, (B, 4 * H), 1)
        g_mask = (lane >= 2 * H) & (lane < 3 * H)

        for layer in range(num_layers):
            w_ih_t = w_refs[3 * layer][...]        # (Din_l, 4H) bf16
            w_hh_t = w_refs[3 * layer + 1][...]    # (H, 4H)     bf16
            bias = w_refs[3 * layer + 2][...]      # (1, 4H)     f32

            # Layer input: raw x for layer 0, previous layer's hidden states
            # (kept in VMEM scratch) otherwise.
            in2d = x_ref[...] if layer == 0 else hid_ref[...].astype(bf16)

            # Hoisted input projection (+ bias) for the whole sequence:
            # one wide MXU matmul instead of T tiny ones in the recurrence.
            xw = jnp.dot(in2d, w_ih_t,
                         preferred_element_type=jnp.float32) + bias    # (T*B, 4H)

            # Recurrent state carried in registers (no VMEM round trips).
            h = h0_ref[layer]                      # (B, H) f32
            c = c0_ref[layer]                      # (B, H) f32

            for t in range(T):                     # static -> fully unrolled
                gates = xw[t * B:(t + 1) * B, :] + jnp.dot(
                    h.astype(bf16), w_hh_t,
                    preferred_element_type=jnp.float32)                # (B, 4H)
                # Full-width EUP activations + lane-mask select; slice once.
                act = jnp.where(g_mask, jnp.tanh(gates),
                                jax.nn.sigmoid(gates))
                i_g = act[:, 0 * H:1 * H]
                f_g = act[:, 1 * H:2 * H]
                g_g = act[:, 2 * H:3 * H]
                o_g = act[:, 3 * H:4 * H]
                c = f_g * c + i_g * g_g            # f32 cell update
                h = o_g * jnp.tanh(c)              # f32 hidden update
                hid_ref[pl.ds(t * B, B), :] = h    # store off the critical path

            hN_ref[layer] = h
            cN_ref[layer] = c

        # Fused final Linear over all timesteps; lane-dense padded store.
        pred_ref[...] = jnp.dot(hid_ref[...].astype(bf16), fc_w_ref[...],
                                preferred_element_type=jnp.float32) + fc_b_ref[...]

    return kernel


_VMEM = pl.BlockSpec(memory_space=pltpu.MemorySpace.VMEM)


# ----------------------------------------------------------------------------
# Wrapper around the single fused pallas_call
# ----------------------------------------------------------------------------
def decoder_forward(params, x, hidden, cell):
    """
    x:      (B, T, input_size)    batch_first input
    hidden: (num_layers, B, H)
    cell:   (num_layers, B, H)
    returns (prediction, hidden_out, cell_out) matching the PyTorch Decoder.
    """
    B, T, _ = x.shape
    num_layers = len(params["lstm"])
    H = params["lstm"][0]["w_hh"].shape[1]
    F = params["fc_w"].shape[0]
    f_pad = max(128, -(-F // 128) * 128)
    bf16 = jnp.bfloat16

    # One tiny one-off layout change (KB-scale): (B, T, D) -> time-major (T*B, D).
    x2d = jnp.transpose(x, (1, 0, 2)).reshape(T * B, -1).astype(bf16)

    inputs = [x2d, hidden.astype(jnp.float32), cell.astype(jnp.float32)]
    flops = 0
    for p in params["lstm"]:
        din = p["w_ih"].shape[1]
        inputs.append(jnp.transpose(p["w_ih"]).astype(bf16))       # (Din, 4H)
        inputs.append(jnp.transpose(p["w_hh"]).astype(bf16))       # (H, 4H)
        inputs.append((p["b_ih"] + p["b_hh"]).reshape(1, 4 * H)
                      .astype(jnp.float32))
        flops += 2 * T * B * (din + H) * 4 * H
    fc_w_t = jnp.zeros((H, f_pad), bf16).at[:, :F].set(
        jnp.transpose(params["fc_w"]).astype(bf16))
    fc_b = jnp.zeros((1, f_pad), jnp.float32).at[:, :F].set(params["fc_b"])
    inputs += [fc_w_t, fc_b]
    flops += 2 * T * B * H * f_pad

    out_shape = (
        jax.ShapeDtypeStruct((T * B, f_pad), jnp.float32),   # padded predictions
        jax.ShapeDtypeStruct((num_layers, B, H), jnp.float32),
        jax.ShapeDtypeStruct((num_layers, B, H), jnp.float32),
    )

    in_bytes = sum(int(a.size) * a.dtype.itemsize for a in inputs)
    out_bytes = sum(math.prod(s.shape) * jnp.dtype(s.dtype).itemsize
                    for s in out_shape)
    cost = pl.CostEstimate(
        flops=flops,
        transcendentals=num_layers * T * B * (8 * H + H),
        bytes_accessed=in_bytes + out_bytes)

    kernel = _make_decoder_kernel(num_layers, T, B, H, f_pad)
    pred_pad, hidden_out, cell_out = pl.pallas_call(
        kernel,
        out_shape=out_shape,
        in_specs=[_VMEM] * len(inputs),
        out_specs=(_VMEM, _VMEM, _VMEM),
        scratch_shapes=[pltpu.VMEM((T * B, H), jnp.float32)],
        cost_estimate=cost,
    )(*inputs)

    # (T*B, F_pad) time-major -> (B, T, F); then apply torch's out.squeeze(0).
    pred = jnp.transpose(pred_pad.reshape(T, B, f_pad)[:, :, :F], (1, 0, 2))
    prediction = pred[0] if B == 1 else pred
    return prediction, hidden_out, cell_out


# ----------------------------------------------------------------------------
# Parameter init (deterministic, PyTorch-style uniform(-1/sqrt(H), 1/sqrt(H)))
# ----------------------------------------------------------------------------
def init_decoder_params(key, input_size, hidden_size, num_layers):
    bound = 1.0 / math.sqrt(hidden_size)
    params = {"lstm": []}
    for layer in range(num_layers):
        din = input_size if layer == 0 else hidden_size
        key, k0, k1, k2, k3 = jax.random.split(key, 5)
        params["lstm"].append({
            "w_ih": jax.random.uniform(k0, (4 * hidden_size, din),
                                       jnp.float32, -bound, bound),
            "w_hh": jax.random.uniform(k1, (4 * hidden_size, hidden_size),
                                       jnp.float32, -bound, bound),
            "b_ih": jax.random.uniform(k2, (4 * hidden_size,),
                                       jnp.float32, -bound, bound),
            "b_hh": jax.random.uniform(k3, (4 * hidden_size,),
                                       jnp.float32, -bound, bound),
        })
    key, kw, kb = jax.random.split(key, 3)
    params["fc_w"] = jax.random.uniform(kw, (input_size, hidden_size),
                                        jnp.float32, -bound, bound)
    params["fc_b"] = jax.random.uniform(kb, (input_size,),
                                        jnp.float32, -bound, bound)
    return params


# ----------------------------------------------------------------------------
# Pure-JAX reference mirroring the kernel's bf16-matmul / f32-state precision
# ----------------------------------------------------------------------------
def _reference_forward(params, x, hidden, cell):
    B, T, _ = x.shape
    bf16 = jnp.bfloat16
    layer_in = x
    h_finals, c_finals = [], []
    for layer, p in enumerate(params["lstm"]):
        H = p["w_hh"].shape[1]
        w_ih_t = jnp.transpose(p["w_ih"]).astype(bf16)
        w_hh_t = jnp.transpose(p["w_hh"]).astype(bf16)
        bias = (p["b_ih"] + p["b_hh"])[None, :]
        h, c = hidden[layer], cell[layer]
        outs = []
        for t in range(T):
            x_t = layer_in[:, t, :].astype(bf16)
            gates = (jnp.dot(x_t, w_ih_t, preferred_element_type=jnp.float32)
                     + jnp.dot(h.astype(bf16), w_hh_t,
                               preferred_element_type=jnp.float32)
                     + bias)
            i = jax.nn.sigmoid(gates[:, 0 * H:1 * H])
            f = jax.nn.sigmoid(gates[:, 1 * H:2 * H])
            g = jnp.tanh(gates[:, 2 * H:3 * H])
            o = jax.nn.sigmoid(gates[:, 3 * H:4 * H])
            c = f * c + i * g
            h = o * jnp.tanh(c)
            outs.append(h)
        layer_in = jnp.stack(outs, axis=1)
        h_finals.append(h)
        c_finals.append(c)
    out = layer_in
    out_sq = out[0] if out.shape[0] == 1 else out
    Hh = out.shape[-1]
    pred = (jnp.dot(out_sq.reshape(-1, Hh).astype(bf16),
                    jnp.transpose(params["fc_w"]).astype(bf16),
                    preferred_element_type=jnp.float32)
            + params["fc_b"]).reshape(out_sq.shape[:-1] + (params["fc_w"].shape[0],))
    return pred, jnp.stack(h_finals, 0), jnp.stack(c_finals, 0)


# ----------------------------------------------------------------------------
if __name__ == "__main__":
    INPUT_SIZE = 16
    HIDDEN_SIZE = 32
    NUM_LAYERS = 2
    BATCH = 2
    SEQ = 8

    key = jax.random.PRNGKey(0)
    key, kp, kx, kh, kc = jax.random.split(key, 5)

    params = init_decoder_params(kp, INPUT_SIZE, HIDDEN_SIZE, NUM_LAYERS)
    x = jax.random.normal(kx, (BATCH, SEQ, INPUT_SIZE), jnp.float32)
    hidden = jax.random.normal(kh, (NUM_LAYERS, BATCH, HIDDEN_SIZE), jnp.float32)
    cell = jax.random.normal(kc, (NUM_LAYERS, BATCH, HIDDEN_SIZE), jnp.float32)

    fwd = jax.jit(decoder_forward)
    prediction, hidden_out, cell_out = fwd(params, x, hidden, cell)
    jax.block_until_ready((prediction, hidden_out, cell_out))

    # Correctness sanity check (bf16 matmuls in both paths, f32 state).
    ref_pred, ref_h, ref_c = _reference_forward(params, x, hidden, cell)
    assert prediction.shape == (BATCH, SEQ, INPUT_SIZE)
    assert hidden_out.shape == (NUM_LAYERS, BATCH, HIDDEN_SIZE)
    assert cell_out.shape == (NUM_LAYERS, BATCH, HIDDEN_SIZE)
    assert jnp.allclose(prediction, ref_pred, atol=5e-3, rtol=5e-3), \
        float(jnp.max(jnp.abs(prediction - ref_pred)))
    assert jnp.allclose(hidden_out, ref_h, atol=5e-3, rtol=5e-3)
    assert jnp.allclose(cell_out, ref_c, atol=5e-3, rtol=5e-3)

    print("KERNEL_OK")
</pallas_src>

<mosaic_0001>
module attributes {stable_mosaic.version = 11 : i64} {
  func.func @kernel(%arg0: memref<16x16xbf16, #tpu.memory_space<vmem>>, %arg1: memref<2x2x32xf32, #tpu.memory_space<vmem>>, %arg2: memref<2x2x32xf32, #tpu.memory_space<vmem>>, %arg3: memref<16x128xbf16, #tpu.memory_space<vmem>>, %arg4: memref<32x128xbf16, #tpu.memory_space<vmem>>, %arg5: memref<1x128xf32, #tpu.memory_space<vmem>>, %arg6: memref<32x128xbf16, #tpu.memory_space<vmem>>, %arg7: memref<32x128xbf16, #tpu.memory_space<vmem>>, %arg8: memref<1x128xf32, #tpu.memory_space<vmem>>, %arg9: memref<32x128xbf16, #tpu.memory_space<vmem>>, %arg10: memref<1x128xf32, #tpu.memory_space<vmem>>, %arg11: memref<16x128xf32, #tpu.memory_space<vmem>>, %arg12: memref<2x2x32xf32, #tpu.memory_space<vmem>>, %arg13: memref<2x2x32xf32, #tpu.memory_space<vmem>>, %arg14: memref<16x32xf32, #tpu.memory_space<vmem>>) attributes {dimension_semantics = [], scalar_prefetch = 0 : i64, scratch_operands = 1 : i64, tpu.core_type = #tpu.core_type<tc>} {
    %0 = tpu.iota {dimensions = array<i32: 1>} : vector<2x128xi32>
    %c64_i32 = arith.constant 64 : i32
    %1 = vector.broadcast %c64_i32 : i32 to vector<2x128xi32>
    %2 = arith.cmpi sge, %0, %1 : vector<2x128xi32>
    %c96_i32 = arith.constant 96 : i32
    %3 = vector.broadcast %c96_i32 : i32 to vector<2x128xi32>
    %4 = arith.cmpi slt, %0, %3 : vector<2x128xi32>
    %5 = arith.andi %2, %4 : vector<2x128xi1>
    %c0 = arith.constant 0 : index
    %c0_0 = arith.constant 0 : index
    %6 = vector.load %arg3[%c0, %c0_0] : memref<16x128xbf16, #tpu.memory_space<vmem>>, vector<16x128xbf16>
    %c0_1 = arith.constant 0 : index
    %c0_2 = arith.constant 0 : index
    %7 = vector.load %arg4[%c0_1, %c0_2] : memref<32x128xbf16, #tpu.memory_space<vmem>>, vector<32x128xbf16>
    %c0_3 = arith.constant 0 : index
    %c0_4 = arith.constant 0 : index
    %8 = vector.load %arg5[%c0_3, %c0_4] : memref<1x128xf32, #tpu.memory_space<vmem>>, vector<1x128xf32>
    %c0_5 = arith.constant 0 : index
    %c0_6 = arith.constant 0 : index
    %9 = vector.load %arg0[%c0_5, %c0_6] : memref<16x16xbf16, #tpu.memory_space<vmem>>, vector<16x16xbf16>
    %cst = arith.constant dense<0.000000e+00> : vector<16x128xf32>
    %10 = tpu.matmul %9, %6, %cst {dimension_numbers = #tpu.dot_dimension_numbers<[1], [0], [0], [1], [0, 0, 1, 1], [], []>} : vector<16x16xbf16>, vector<16x128xbf16>, vector<16x128xf32> -> vector<16x128xf32>
    %11 = vector.broadcast %8 : vector<1x128xf32> to vector<16x128xf32>
    %12 = arith.addf %10, %11 : vector<16x128xf32>
    %c0_7 = arith.constant 0 : index
    %c0_8 = arith.constant 0 : index
    %c0_9 = arith.constant 0 : index
    %13 = vector.load %arg1[%c0_7, %c0_8, %c0_9] : memref<2x2x32xf32, #tpu.memory_space<vmem>>, vector<1x2x32xf32>
    %14 = vector.shape_cast %13 : vector<1x2x32xf32> to vector<2x32xf32>
    %c0_10 = arith.constant 0 : index
    %c0_11 = arith.constant 0 : index
    %c0_12 = arith.constant 0 : index
    %15 = vector.load %arg2[%c0_10, %c0_11, %c0_12] : memref<2x2x32xf32, #tpu.memory_space<vmem>>, vector<1x2x32xf32>
    %16 = vector.shape_cast %15 : vector<1x2x32xf32> to vector<2x32xf32>
    %17 = vector.extract_strided_slice %12 {offsets = [0, 0], sizes = [2, 128], strides = [1, 1]} : vector<16x128xf32> to vector<2x128xf32>
    %18 = arith.truncf %14 : vector<2x32xf32> to vector<2x32xbf16>
    %cst_13 = arith.constant dense<0.000000e+00> : vector<2x128xf32>
    %19 = tpu.matmul %18, %7, %cst_13 {dimension_numbers = #tpu.dot_dimension_numbers<[1], [0], [0], [1], [0, 0, 1, 1], [], []>} : vector<2x32xbf16>, vector<32x128xbf16>, vector<2x128xf32> -> vector<2x128xf32>
    %20 = arith.addf %17, %19 : vector<2x128xf32>
    %21 = math.tanh %20 : vector<2x128xf32>
    %22 = arith.negf %20 : vector<2x128xf32>
    %23 = math.exp %22 : vector<2x128xf32>
    %cst_14 = arith.constant 1.000000e+00 : f32
    %24 = vector.broadcast %cst_14 : f32 to vector<2x128xf32>
    %25 = arith.addf %24, %23 : vector<2x128xf32>
    %26 = arith.divf %24, %25 : vector<2x128xf32>
    %27 = arith.select %5, %21, %26 : vector<2x128xi1>, vector<2x128xf32>
    %28 = vector.extract_strided_slice %27 {offsets = [0, 0], sizes = [2, 32], strides = [1, 1]} : vector<2x128xf32> to vector<2x32xf32>
    %29 = vector.extract_strided_slice %27 {offsets = [0, 32], sizes = [2, 32], strides = [1, 1]} : vector<2x128xf32> to vector<2x32xf32>
    %30 = vector.extract_strided_slice %27 {offsets = [0, 64], sizes = [2, 32], strides = [1, 1]} : vector<2x128xf32> to vector<2x32xf32>
    %31 = vector.extract_strided_slice %27 {offsets = [0, 96], sizes = [2, 32], strides = [1, 1]} : vector<2x128xf32> to vector<2x32xf32>
    %32 = arith.mulf %29, %16 : vector<2x32xf32>
    %33 = arith.mulf %28, %30 : vector<2x32xf32>
    %34 = arith.addf %32, %33 : vector<2x32xf32>
    %35 = math.tanh %34 : vector<2x32xf32>
    %36 = arith.mulf %31, %35 : vector<2x32xf32>
    %c0_15 = arith.constant 0 : index
    %c0_16 = arith.constant 0 : index
    %37 = vector.load %arg14[%c0_15, %c0_16] : memref<16x32xf32, #tpu.memory_space<vmem>>, vector<2x32xf32>
    tpu.vector_store %arg14[%c0_15, %c0_16], %36 {strides = array<i32>} : memref<16x32xf32, #tpu.memory_space<vmem>>, vector<2x32xf32>,
    %38 = vector.extract_strided_slice %12 {offsets = [2, 0], sizes = [2, 128], strides = [1, 1]} : vector<16x128xf32> to vector<2x128xf32>
    %39 = arith.truncf %36 : vector<2x32xf32> to vector<2x32xbf16>
    %cst_17 = arith.constant dense<0.000000e+00> : vector<2x128xf32>
    %40 = tpu.matmul %39, %7, %cst_17 {dimension_numbers = #tpu.dot_dimension_numbers<[1], [0], [0], [1], [0, 0, 1, 1], [], []>} : vector<2x32xbf16>, vector<32x128xbf16>, vector<2x128xf32> -> vector<2x128xf32>
    %41 = arith.addf %38, %40 : vector<2x128xf32>
    %42 = math.tanh %41 : vector<2x128xf32>
    %43 = arith.negf %41 : vector<2x128xf32>
    %44 = math.exp %43 : vector<2x128xf32>
    %cst_18 = arith.constant 1.000000e+00 : f32
    %45 = vector.broadcast %cst_18 : f32 to vector<2x128xf32>
    %46 = arith.addf %45, %44 : vector<2x128xf32>
    %47 = arith.divf %45, %46 : vector<2x128xf32>
    %48 = arith.select %5, %42, %47 : vector<2x128xi1>, vector<2x128xf32>
    %49 = vector.extract_strided_slice %48 {offsets = [0, 0], sizes = [2, 32], strides = [1, 1]} : vector<2x128xf32> to vector<2x32xf32>
    %50 = vector.extract_strided_slice %48 {offsets = [0, 32], sizes = [2, 32], strides = [1, 1]} : vector<2x128xf32> to vector<2x32xf32>
    %51 = vector.extract_strided_slice %48 {offsets = [0, 64], sizes = [2, 32], strides = [1, 1]} : vector<2x128xf32> to vector<2x32xf32>
    %52 = vector.extract_strided_slice %48 {offsets = [0, 96], sizes = [2, 32], strides = [1, 1]} : vector<2x128xf32> to vector<2x32xf32>
    %53 = arith.mulf %50, %34 : vector<2x32xf32>
    %54 = arith.mulf %49, %51 : vector<2x32xf32>
    %55 = arith.addf %53, %54 : vector<2x32xf32>
    %56 = math.tanh %55 : vector<2x32xf32>
    %57 = arith.mulf %52, %56 : vector<2x32xf32>
    %c2 = arith.constant 2 : index
    %c0_19 = arith.constant 0 : index
    %58 = vector.load %arg14[%c2, %c0_19] : memref<16x32xf32, #tpu.memory_space<vmem>>, vector<2x32xf32>
    tpu.vector_store %arg14[%c2, %c0_19], %57 {strides = array<i32>} : memref<16x32xf32, #tpu.memory_space<vmem>>, vector<2x32xf32>,
    %59 = vector.extract_strided_slice %12 {offsets = [4, 0], sizes = [2, 128], strides = [1, 1]} : vector<16x128xf32> to vector<2x128xf32>
    %60 = arith.truncf %57 : vector<2x32xf32> to vector<2x32xbf16>
    %cst_20 = arith.constant dense<0.000000e+00> : vector<2x128xf32>
    %61 = tpu.matmul %60, %7, %cst_20 {dimension_numbers = #tpu.dot_dimension_numbers<[1], [0], [0], [1], [0, 0, 1, 1], [], []>} : vector<2x32xbf16>, vector<32x128xbf16>, vector<2x128xf32> -> vector<2x128xf32>
    %62 = arith.addf %59, %61 : vector<2x128xf32>
    %63 = math.tanh %62 : vector<2x128xf32>
    %64 = arith.negf %62 : vector<2x128xf32>
    %65 = math.exp %64 : vector<2x128xf32>
    %cst_21 = arith.constant 1.000000e+00 : f32
    %66 = vector.broadcast %cst_21 : f32 to vector<2x128xf32>
    %67 = arith.addf %66, %65 : vector<2x128xf32>
    %68 = arith.divf %66, %67 : vector<2x128xf32>
    %69 = arith.select %5, %63, %68 : vector<2x128xi1>, vector<2x128xf32>
    %70 = vector.extract_strided_slice %69 {offsets = [0, 0], sizes = [2, 32], strides = [1, 1]} : vector<2x128xf32> to vector<2x32xf32>
    %71 = vector.extract_strided_slice %69 {offsets = [0, 32], sizes = [2, 32], strides = [1, 1]} : vector<2x128xf32> to vector<2x32xf32>
    %72 = vector.extract_strided_slice %69 {offsets = [0, 64], sizes = [2, 32], strides = [1, 1]} : vector<2x128xf32> to vector<2x32xf32>
    %73 = vector.extract_strided_slice %69 {offsets = [0, 96], sizes = [2, 32], strides = [1, 1]} : vector<2x128xf32> to vector<2x32xf32>
    %74 = arith.mulf %71, %55 : vector<2x32xf32>
    %75 = arith.mulf %70, %72 : vector<2x32xf32>
    %76 = arith.addf %74, %75 : vector<2x32xf32>
    %77 = math.tanh %76 : vector<2x32xf32>
    %78 = arith.mulf %73, %77 : vector<2x32xf32>
    %c4 = arith.constant 4 : index
    %c0_22 = arith.constant 0 : index
    %79 = vector.load %arg14[%c4, %c0_22] : memref<16x32xf32, #tpu.memory_space<vmem>>, vector<2x32xf32>
    tpu.vector_store %arg14[%c4, %c0_22], %78 {strides = array<i32>} : memref<16x32xf32, #tpu.memory_space<vmem>>, vector<2x32xf32>,
    %80 = vector.extract_strided_slice %12 {offsets = [6, 0], sizes = [2, 128], strides = [1, 1]} : vector<16x128xf32> to vector<2x128xf32>
    %81 = arith.truncf %78 : vector<2x32xf32> to vector<2x32xbf16>
    %cst_23 = arith.constant dense<0.000000e+00> : vector<2x128xf32>
    %82 = tpu.matmul %81, %7, %cst_23 {dimension_numbers = #tpu.dot_dimension_numbers<[1], [0], [0], [1], [0, 0, 1, 1], [], []>} : vector<2x32xbf16>, vector<32x128xbf16>, vector<2x128xf32> -> vector<2x128xf32>
    %83 = arith.addf %80, %82 : vector<2x128xf32>
    %84 = math.tanh %83 : vector<2x128xf32>
    %85 = arith.negf %83 : vector<2x128xf32>
    %86 = math.exp %85 : vector<2x128xf32>
    %cst_24 = arith.constant 1.000000e+00 : f32
    %87 = vector.broadcast %cst_24 : f32 to vector<2x128xf32>
    %88 = arith.addf %87, %86 : vector<2x128xf32>
    %89 = arith.divf %87, %88 : vector<2x128xf32>
    %90 = arith.select %5, %84, %89 : vector<2x128xi1>, vector<2x128xf32>
    %91 = vector.extract_strided_slice %90 {offsets = [0, 0], sizes = [2, 32], strides = [1, 1]} : vector<2x128xf32> to vector<2x32xf32>
    %92 = vector.extract_strided_slice %90 {offsets = [0, 32], sizes = [2, 32], strides = [1, 1]} : vector<2x128xf32> to vector<2x32xf32>
    %93 = vector.extract_strided_slice %90 {offsets = [0, 64], sizes = [2, 32], strides = [1, 1]} : vector<2x128xf32> to vector<2x32xf32>
    %94 = vector.extract_strided_slice %90 {offsets = [0, 96], sizes = [2, 32], strides = [1, 1]} : vector<2x128xf32> to vector<2x32xf32>
    %95 = arith.mulf %92, %76 : vector<2x32xf32>
    %96 = arith.mulf %91, %93 : vector<2x32xf32>
    %97 = arith.addf %95, %96 : vector<2x32xf32>
    %98 = math.tanh %97 : vector<2x32xf32>
    %99 = arith.mulf %94, %98 : vector<2x32xf32>
    %c6 = arith.constant 6 : index
    %c0_25 = arith.constant 0 : index
    %100 = vector.load %arg14[%c6, %c0_25] : memref<16x32xf32, #tpu.memory_space<vmem>>, vector<2x32xf32>
    tpu.vector_store %arg14[%c6, %c0_25], %99 {strides = array<i32>} : memref<16x32xf32, #tpu.memory_space<vmem>>, vector<2x32xf32>,
    %101 = vector.extract_strided_slice %12 {offsets = [8, 0], sizes = [2, 128], strides = [1, 1]} : vector<16x128xf32> to vector<2x128xf32>
    %102 = arith.truncf %99 : vector<2x32xf32> to vector<2x32xbf16>
    %cst_26 = arith.constant dense<0.000000e+00> : vector<2x128xf32>
    %103 = tpu.matmul %102, %7, %cst_26 {dimension_numbers = #tpu.dot_dimension_numbers<[1], [0], [0], [1], [0, 0, 1, 1], [], []>} : vector<2x32xbf16>, vector<32x128xbf16>, vector<2x128xf32> -> vector<2x128xf32>
    %104 = arith.addf %101, %103 : vector<2x128xf32>
    %105 = math.tanh %104 : vector<2x128xf32>
    %106 = arith.negf %104 : vector<2x128xf32>
    %107 = math.exp %106 : vector<2x128xf32>
    %cst_27 = arith.constant 1.000000e+00 : f32
    %108 = vector.broadcast %cst_27 : f32 to vector<2x128xf32>
    %109 = arith.addf %108, %107 : vector<2x128xf32>
    %110 = arith.divf %108, %109 : vector<2x128xf32>
    %111 = arith.select %5, %105, %110 : vector<2x128xi1>, vector<2x128xf32>
    %112 = vector.extract_strided_slice %111 {offsets = [0, 0], sizes = [2, 32], strides = [1, 1]} : vector<2x128xf32> to vector<2x32xf32>
    %113 = vector.extract_strided_slice %111 {offsets = [0, 32], sizes = [2, 32], strides = [1, 1]} : vector<2x128xf32> to vector<2x32xf32>
    %114 = vector.extract_strided_slice %111 {offsets = [0, 64], sizes = [2, 32], strides = [1, 1]} : vector<2x128xf32> to vector<2x32xf32>
    %115 = vector.extract_strided_slice %111 {offsets = [0, 96], sizes = [2, 32], strides = [1, 1]} : vector<2x128xf32> to vector<2x32xf32>
    %116 = arith.mulf %113, %97 : vector<2x32xf32>
    %117 = arith.mulf %112, %114 : vector<2x32xf32>
    %118 = arith.addf %116, %117 : vector<2x32xf32>
    %119 = math.tanh %118 : vector<2x32xf32>
    %120 = arith.mulf %115, %119 : vector<2x32xf32>
    %c8 = arith.constant 8 : index
    %c0_28 = arith.constant 0 : index
    %121 = vector.load %arg14[%c8, %c0_28] : memref<16x32xf32, #tpu.memory_space<vmem>>, vector<2x32xf32>
    tpu.vector_store %arg14[%c8, %c0_28], %120 {strides = array<i32>} : memref<16x32xf32, #tpu.memory_space<vmem>>, vector<2x32xf32>,
    %122 = vector.extract_strided_slice %12 {offsets = [10, 0], sizes = [2, 128], strides = [1, 1]} : vector<16x128xf32> to vector<2x128xf32>
    %123 = arith.truncf %120 : vector<2x32xf32> to vector<2x32xbf16>
    %cst_29 = arith.constant dense<0.000000e+00> : vector<2x128xf32>
    %124 = tpu.matmul %123, %7, %cst_29 {dimension_numbers = #tpu.dot_dimension_numbers<[1], [0], [0], [1], [0, 0, 1, 1], [], []>} : vector<2x32xbf16>, vector<32x128xbf16>, vector<2x128xf32> -> vector<2x128xf32>
    %125 = arith.addf %122, %124 : vector<2x128xf32>
    %126 = math.tanh %125 : vector<2x128xf32>
    %127 = arith.negf %125 : vector<2x128xf32>
    %128 = math.exp %127 : vector<2x128xf32>
    %cst_30 = arith.constant 1.000000e+00 : f32
    %129 = vector.broadcast %cst_30 : f32 to vector<2x128xf32>
    %130 = arith.addf %129, %128 : vector<2x128xf32>
    %131 = arith.divf %129, %130 : vector<2x128xf32>
    %132 = arith.select %5, %126, %131 : vector<2x128xi1>, vector<2x128xf32>
    %133 = vector.extract_strided_slice %132 {offsets = [0, 0], sizes = [2, 32], strides = [1, 1]} : vector<2x128xf32> to vector<2x32xf32>
    %134 = vector.extract_strided_slice %132 {offsets = [0, 32], sizes = [2, 32], strides = [1, 1]} : vector<2x128xf32> to vector<2x32xf32>
    %135 = vector.extract_strided_slice %132 {offsets = [0, 64], sizes = [2, 32], strides = [1, 1]} : vector<2x128xf32> to vector<2x32xf32>
    %136 = vector.extract_strided_slice %132 {offsets = [0, 96], sizes = [2, 32], strides = [1, 1]} : vector<2x128xf32> to vector<2x32xf32>
    %137 = arith.mulf %134, %118 : vector<2x32xf32>
    %138 = arith.mulf %133, %135 : vector<2x32xf32>
    %139 = arith.addf %137, %138 : vector<2x32xf32>
    %140 = math.tanh %139 : vector<2x32xf32>
    %141 = arith.mulf %136, %140 : vector<2x32xf32>
    %c10 = arith.constant 10 : index
    %c0_31 = arith.constant 0 : index
    %142 = vector.load %arg14[%c10, %c0_31] : memref<16x32xf32, #tpu.memory_space<vmem>>, vector<2x32xf32>
    tpu.vector_store %arg14[%c10, %c0_31], %141 {strides = array<i32>} : memref<16x32xf32, #tpu.memory_space<vmem>>, vector<2x32xf32>,
    %143 = vector.extract_strided_slice %12 {offsets = [12, 0], sizes = [2, 128], strides = [1, 1]} : vector<16x128xf32> to vector<2x128xf32>
    %144 = arith.truncf %141 : vector<2x32xf32> to vector<2x32xbf16>
    %cst_32 = arith.constant dense<0.000000e+00> : vector<2x128xf32>
    %145 = tpu.matmul %144, %7, %cst_32 {dimension_numbers = #tpu.dot_dimension_numbers<[1], [0], [0], [1], [0, 0, 1, 1], [], []>} : vector<2x32xbf16>, vector<32x128xbf16>, vector<2x128xf32> -> vector<2x128xf32>
    %146 = arith.addf %143, %145 : vector<2x128xf32>
    %147 = math.tanh %146 : vector<2x128xf32>
    %148 = arith.negf %146 : vector<2x128xf32>
    %149 = math.exp %148 : vector<2x128xf32>
    %cst_33 = arith.constant 1.000000e+00 : f32
    %150 = vector.broadcast %cst_33 : f32 to vector<2x128xf32>
    %151 = arith.addf %150, %149 : vector<2x128xf32>
    %152 = arith.divf %150, %151 : vector<2x128xf32>
    %153 = arith.select %5, %147, %152 : vector<2x128xi1>, vector<2x128xf32>
    %154 = vector.extract_strided_slice %153 {offsets = [0, 0], sizes = [2, 32], strides = [1, 1]} : vector<2x128xf32> to vector<2x32xf32>
    %155 = vector.extract_strided_slice %153 {offsets = [0, 32], sizes = [2, 32], strides = [1, 1]} : vector<2x128xf32> to vector<2x32xf32>
    %156 = vector.extract_strided_slice %153 {offsets = [0, 64], sizes = [2, 32], strides = [1, 1]} : vector<2x128xf32> to vector<2x32xf32>
    %157 = vector.extract_strided_slice %153 {offsets = [0, 96], sizes = [2, 32], strides = [1, 1]} : vector<2x128xf32> to vector<2x32xf32>
    %158 = arith.mulf %155, %139 : vector<2x32xf32>
    %159 = arith.mulf %154, %156 : vector<2x32xf32>
    %160 = arith.addf %158, %159 : vector<2x32xf32>
    %161 = math.tanh %160 : vector<2x32xf32>
    %162 = arith.mulf %157, %161 : vector<2x32xf32>
    %c12 = arith.constant 12 : index
    %c0_34 = arith.constant 0 : index
    %163 = vector.load %arg14[%c12, %c0_34] : memref<16x32xf32, #tpu.memory_space<vmem>>, vector<2x32xf32>
    tpu.vector_store %arg14[%c12, %c0_34], %162 {strides = array<i32>} : memref<16x32xf32, #tpu.memory_space<vmem>>, vector<2x32xf32>,
    %164 = vector.extract_strided_slice %12 {offsets = [14, 0], sizes = [2, 128], strides = [1, 1]} : vector<16x128xf32> to vector<2x128xf32>
    %165 = arith.truncf %162 : vector<2x32xf32> to vector<2x32xbf16>
    %cst_35 = arith.constant dense<0.000000e+00> : vector<2x128xf32>
    %166 = tpu.matmul %165, %7, %cst_35 {dimension_numbers = #tpu.dot_dimension_numbers<[1], [0], [0], [1], [0, 0, 1, 1], [], []>} : vector<2x32xbf16>, vector<32x128xbf16>, vector<2x128xf32> -> vector<2x128xf32>
    %167 = arith.addf %164, %166 : vector<2x128xf32>
    %168 = math.tanh %167 : vector<2x128xf32>
    %169 = arith.negf %167 : vector<2x128xf32>
    %170 = math.exp %169 : vector<2x128xf32>
    %cst_36 = arith.constant 1.000000e+00 : f32
    %171 = vector.broadcast %cst_36 : f32 to vector<2x128xf32>
    %172 = arith.addf %171, %170 : vector<2x128xf32>
    %173 = arith.divf %171, %172 : vector<2x128xf32>
    %174 = arith.select %5, %168, %173 : vector<2x128xi1>, vector<2x128xf32>
    %175 = vector.extract_strided_slice %174 {offsets = [0, 0], sizes = [2, 32], strides = [1, 1]} : vector<2x128xf32> to vector<2x32xf32>
    %176 = vector.extract_strided_slice %174 {offsets = [0, 32], sizes = [2, 32], strides = [1, 1]} : vector<2x128xf32> to vector<2x32xf32>
    %177 = vector.extract_strided_slice %174 {offsets = [0, 64], sizes = [2, 32], strides = [1, 1]} : vector<2x128xf32> to vector<2x32xf32>
    %178 = vector.extract_strided_slice %174 {offsets = [0, 96], sizes = [2, 32], strides = [1, 1]} : vector<2x128xf32> to vector<2x32xf32>
    %179 = arith.mulf %176, %160 : vector<2x32xf32>
    %180 = arith.mulf %175, %177 : vector<2x32xf32>
    %181 = arith.addf %179, %180 : vector<2x32xf32>
    %182 = math.tanh %181 : vector<2x32xf32>
    %183 = arith.mulf %178, %182 : vector<2x32xf32>
    %c14 = arith.constant 14 : index
    %c0_37 = arith.constant 0 : index
    %184 = vector.load %arg14[%c14, %c0_37] : memref<16x32xf32, #tpu.memory_space<vmem>>, vector<2x32xf32>
    tpu.vector_store %arg14[%c14, %c0_37], %183 {strides = array<i32>} : memref<16x32xf32, #tpu.memory_space<vmem>>, vector<2x32xf32>,
    %c0_38 = arith.constant 0 : index
    %c0_39 = arith.constant 0 : index
    %c0_40 = arith.constant 0 : index
    %185 = vector.load %arg12[%c0_38, %c0_39, %c0_40] : memref<2x2x32xf32, #tpu.memory_space<vmem>>, vector<1x2x32xf32>
    %186 = vector.shape_cast %185 : vector<1x2x32xf32> to vector<2x32xf32>
    %187 = vector.shape_cast %183 : vector<2x32xf32> to vector<1x2x32xf32>
    tpu.vector_store %arg12[%c0_38, %c0_39, %c0_40], %187 {strides = array<i32>} : memref<2x2x32xf32, #tpu.memory_space<vmem>>, vector<1x2x32xf32>,
    %c0_41 = arith.constant 0 : index
    %c0_42 = arith.constant 0 : index
    %c0_43 = arith.constant 0 : index
    %188 = vector.load %arg13[%c0_41, %c0_42, %c0_43] : memref<2x2x32xf32, #tpu.memory_space<vmem>>, vector<1x2x32xf32>
    %189 = vector.shape_cast %188 : vector<1x2x32xf32> to vector<2x32xf32>
    %190 = vector.shape_cast %181 : vector<2x32xf32> to vector<1x2x32xf32>
    tpu.vector_store %arg13[%c0_41, %c0_42, %c0_43], %190 {strides = array<i32>} : memref<2x2x32xf32, #tpu.memory_space<vmem>>, vector<1x2x32xf32>,
    %c0_44 = arith.constant 0 : index
    %c0_45 = arith.constant 0 : index
    %191 = vector.load %arg6[%c0_44, %c0_45] : memref<32x128xbf16, #tpu.memory_space<vmem>>, vector<32x128xbf16>
    %c0_46 = arith.constant 0 : index
    %c0_47 = arith.constant 0 : index
    %192 = vector.load %arg7[%c0_46, %c0_47] : memref<32x128xbf16, #tpu.memory_space<vmem>>, vector<32x128xbf16>
    %c0_48 = arith.constant 0 : index
    %c0_49 = arith.constant 0 : index
    %193 = vector.load %arg8[%c0_48, %c0_49] : memref<1x128xf32, #tpu.memory_space<vmem>>, vector<1x128xf32>
    %c0_50 = arith.constant 0 : index
    %c0_51 = arith.constant 0 : index
    %194 = vector.load %arg14[%c0_50, %c0_51] : memref<16x32xf32, #tpu.memory_space<vmem>>, vector<16x32xf32>
    %195 = arith.truncf %194 : vector<16x32xf32> to vector<16x32xbf16>
    %cst_52 = arith.constant dense<0.000000e+00> : vector<16x128xf32>
    %196 = tpu.matmul %195, %191, %cst_52 {dimension_numbers = #tpu.dot_dimension_numbers<[1], [0], [0], [1], [0, 0, 1, 1], [], []>} : vector<16x32xbf16>, vector<32x128xbf16>, vector<16x128xf32> -> vector<16x128xf32>
    %197 = vector.broadcast %193 : vector<1x128xf32> to vector<16x128xf32>
    %198 = arith.addf %196, %197 : vector<16x128xf32>
    %c1 = arith.constant 1 : index
    %c0_53 = arith.constant 0 : index
    %c0_54 = arith.constant 0 : index
    %199 = vector.load %arg1[%c1, %c0_53, %c0_54] : memref<2x2x32xf32, #tpu.memory_space<vmem>>, vector<1x2x32xf32>
    %200 = vector.shape_cast %199 : vector<1x2x32xf32> to vector<2x32xf32>
    %c1_55 = arith.constant 1 : index
    %c0_56 = arith.constant 0 : index
    %c0_57 = arith.constant 0 : index
    %201 = vector.load %arg2[%c1_55, %c0_56, %c0_57] : memref<2x2x32xf32, #tpu.memory_space<vmem>>, vector<1x2x32xf32>
    %202 = vector.shape_cast %201 : vector<1x2x32xf32> to vector<2x32xf32>
    %203 = vector.extract_strided_slice %198 {offsets = [0, 0], sizes = [2, 128], strides = [1, 1]} : vector<16x128xf32> to vector<2x128xf32>
    %204 = arith.truncf %200 : vector<2x32xf32> to vector<2x32xbf16>
    %cst_58 = arith.constant dense<0.000000e+00> : vector<2x128xf32>
    %205 = tpu.matmul %204, %192, %cst_58 {dimension_numbers = #tpu.dot_dimension_numbers<[1], [0], [0], [1], [0, 0, 1, 1], [], []>} : vector<2x32xbf16>, vector<32x128xbf16>, vector<2x128xf32> -> vector<2x128xf32>
    %206 = arith.addf %203, %205 : vector<2x128xf32>
    %207 = math.tanh %206 : vector<2x128xf32>
    %208 = arith.negf %206 : vector<2x128xf32>
    %209 = math.exp %208 : vector<2x128xf32>
    %cst_59 = arith.constant 1.000000e+00 : f32
    %210 = vector.broadcast %cst_59 : f32 to vector<2x128xf32>
    %211 = arith.addf %210, %209 : vector<2x128xf32>
    %212 = arith.divf %210, %211 : vector<2x128xf32>
    %213 = arith.select %5, %207, %212 : vector<2x128xi1>, vector<2x128xf32>
    %214 = vector.extract_strided_slice %213 {offsets = [0, 0], sizes = [2, 32], strides = [1, 1]} : vector<2x128xf32> to vector<2x32xf32>
    %215 = vector.extract_strided_slice %213 {offsets = [0, 32], sizes = [2, 32], strides = [1, 1]} : vector<2x128xf32> to vector<2x32xf32>
    %216 = vector.extract_strided_slice %213 {offsets = [0, 64], sizes = [2, 32], strides = [1, 1]} : vector<2x128xf32> to vector<2x32xf32>
    %217 = vector.extract_strided_slice %213 {offsets = [0, 96], sizes = [2, 32], strides = [1, 1]} : vector<2x128xf32> to vector<2x32xf32>
    %218 = arith.mulf %215, %202 : vector<2x32xf32>
    %219 = arith.mulf %214, %216 : vector<2x32xf32>
    %220 = arith.addf %218, %219 : vector<2x32xf32>
    %221 = math.tanh %220 : vector<2x32xf32>
    %222 = arith.mulf %217, %221 : vector<2x32xf32>
    %c0_60 = arith.constant 0 : index
    %c0_61 = arith.constant 0 : index
    %223 = vector.load %arg14[%c0_60, %c0_61] : memref<16x32xf32, #tpu.memory_space<vmem>>, vector<2x32xf32>
    tpu.vector_store %arg14[%c0_60, %c0_61], %222 {strides = array<i32>} : memref<16x32xf32, #tpu.memory_space<vmem>>, vector<2x32xf32>,
    %224 = vector.extract_strided_slice %198 {offsets = [2, 0], sizes = [2, 128], strides = [1, 1]} : vector<16x128xf32> to vector<2x128xf32>
    %225 = arith.truncf %222 : vector<2x32xf32> to vector<2x32xbf16>
    %cst_62 = arith.constant dense<0.000000e+00> : vector<2x128xf32>
    %226 = tpu.matmul %225, %192, %cst_62 {dimension_numbers = #tpu.dot_dimension_numbers<[1], [0], [0], [1], [0, 0, 1, 1], [], []>} : vector<2x32xbf16>, vector<32x128xbf16>, vector<2x128xf32> -> vector<2x128xf32>
    %227 = arith.addf %224, %226 : vector<2x128xf32>
    %228 = math.tanh %227 : vector<2x128xf32>
    %229 = arith.negf %227 : vector<2x128xf32>
    %230 = math.exp %229 : vector<2x128xf32>
    %cst_63 = arith.constant 1.000000e+00 : f32
    %231 = vector.broadcast %cst_63 : f32 to vector<2x128xf32>
    %232 = arith.addf %231, %230 : vector<2x128xf32>
    %233 = arith.divf %231, %232 : vector<2x128xf32>
    %234 = arith.select %5, %228, %233 : vector<2x128xi1>, vector<2x128xf32>
    %235 = vector.extract_strided_slice %234 {offsets = [0, 0], sizes = [2, 32], strides = [1, 1]} : vector<2x128xf32> to vector<2x32xf32>
    %236 = vector.extract_strided_slice %234 {offsets = [0, 32], sizes = [2, 32], strides = [1, 1]} : vector<2x128xf32> to vector<2x32xf32>
    %237 = vector.extract_strided_slice %234 {offsets = [0, 64], sizes = [2, 32], strides = [1, 1]} : vector<2x128xf32> to vector<2x32xf32>
    %238 = vector.extract_strided_slice %234 {offsets = [0, 96], sizes = [2, 32], strides = [1, 1]} : vector<2x128xf32> to vector<2x32xf32>
    %239 = arith.mulf %236, %220 : vector<2x32xf32>
    %240 = arith.mulf %235, %237 : vector<2x32xf32>
    %241 = arith.addf %239, %240 : vector<2x32xf32>
    %242 = math.tanh %241 : vector<2x32xf32>
    %243 = arith.mulf %238, %242 : vector<2x32xf32>
    %c2_64 = arith.constant 2 : index
    %c0_65 = arith.constant 0 : index
    %244 = vector.load %arg14[%c2_64, %c0_65] : memref<16x32xf32, #tpu.memory_space<vmem>>, vector<2x32xf32>
    tpu.vector_store %arg14[%c2_64, %c0_65], %243 {strides = array<i32>} : memref<16x32xf32, #tpu.memory_space<vmem>>, vector<2x32xf32>,
    %245 = vector.extract_strided_slice %198 {offsets = [4, 0], sizes = [2, 128], strides = [1, 1]} : vector<16x128xf32> to vector<2x128xf32>
    %246 = arith.truncf %243 : vector<2x32xf32> to vector<2x32xbf16>
    %cst_66 = arith.constant dense<0.000000e+00> : vector<2x128xf32>
    %247 = tpu.matmul %246, %192, %cst_66 {dimension_numbers = #tpu.dot_dimension_numbers<[1], [0], [0], [1], [0, 0, 1, 1], [], []>} : vector<2x32xbf16>, vector<32x128xbf16>, vector<2x128xf32> -> vector<2x128xf32>
    %248 = arith.addf %245, %247 : vector<2x128xf32>
    %249 = math.tanh %248 : vector<2x128xf32>
    %250 = arith.negf %248 : vector<2x128xf32>
    %251 = math.exp %250 : vector<2x128xf32>
    %cst_67 = arith.constant 1.000000e+00 : f32
    %252 = vector.broadcast %cst_67 : f32 to vector<2x128xf32>
    %253 = arith.addf %252, %251 : vector<2x128xf32>
    %254 = arith.divf %252, %253 : vector<2x128xf32>
    %255 = arith.select %5, %249, %254 : vector<2x128xi1>, vector<2x128xf32>
    %256 = vector.extract_strided_slice %255 {offsets = [0, 0], sizes = [2, 32], strides = [1, 1]} : vector<2x128xf32> to vector<2x32xf32>
    %257 = vector.extract_strided_slice %255 {offsets = [0, 32], sizes = [2, 32], strides = [1, 1]} : vector<2x128xf32> to vector<2x32xf32>
    %258 = vector.extract_strided_slice %255 {offsets = [0, 64], sizes = [2, 32], strides = [1, 1]} : vector<2x128xf32> to vector<2x32xf32>
    %259 = vector.extract_strided_slice %255 {offsets = [0, 96], sizes = [2, 32], strides = [1, 1]} : vector<2x128xf32> to vector<2x32xf32>
    %260 = arith.mulf %257, %241 : vector<2x32xf32>
    %261 = arith.mulf %256, %258 : vector<2x32xf32>
    %262 = arith.addf %260, %261 : vector<2x32xf32>
    %263 = math.tanh %262 : vector<2x32xf32>
    %264 = arith.mulf %259, %263 : vector<2x32xf32>
    %c4_68 = arith.constant 4 : index
    %c0_69 = arith.constant 0 : index
    %265 = vector.load %arg14[%c4_68, %c0_69] : memref<16x32xf32, #tpu.memory_space<vmem>>, vector<2x32xf32>
    tpu.vector_store %arg14[%c4_68, %c0_69], %264 {strides = array<i32>} : memref<16x32xf32, #tpu.memory_space<vmem>>, vector<2x32xf32>,
    %266 = vector.extract_strided_slice %198 {offsets = [6, 0], sizes = [2, 128], strides = [1, 1]} : vector<16x128xf32> to vector<2x128xf32>
    %267 = arith.truncf %264 : vector<2x32xf32> to vector<2x32xbf16>
    %cst_70 = arith.constant dense<0.000000e+00> : vector<2x128xf32>
    %268 = tpu.matmul %267, %192, %cst_70 {dimension_numbers = #tpu.dot_dimension_numbers<[1], [0], [0], [1], [0, 0, 1, 1], [], []>} : vector<2x32xbf16>, vector<32x128xbf16>, vector<2x128xf32> -> vector<2x128xf32>
    %269 = arith.addf %266, %268 : vector<2x128xf32>
    %270 = math.tanh %269 : vector<2x128xf32>
    %271 = arith.negf %269 : vector<2x128xf32>
    %272 = math.exp %271 : vector<2x128xf32>
    %cst_71 = arith.constant 1.000000e+00 : f32
    %273 = vector.broadcast %cst_71 : f32 to vector<2x128xf32>
    %274 = arith.addf %273, %272 : vector<2x128xf32>
    %275 = arith.divf %273, %274 : vector<2x128xf32>
    %276 = arith.select %5, %270, %275 : vector<2x128xi1>, vector<2x128xf32>
    %277 = vector.extract_strided_slice %276 {offsets = [0, 0], sizes = [2, 32], strides = [1, 1]} : vector<2x128xf32> to vector<2x32xf32>
    %278 = vector.extract_strided_slice %276 {offsets = [0, 32], sizes = [2, 32], strides = [1, 1]} : vector<2x128xf32> to vector<2x32xf32>
    %279 = vector.extract_strided_slice %276 {offsets = [0, 64], sizes = [2, 32], strides = [1, 1]} : vector<2x128xf32> to vector<2x32xf32>
    %280 = vector.extract_strided_slice %276 {offsets = [0, 96], sizes = [2, 32], strides = [1, 1]} : vector<2x128xf32> to vector<2x32xf32>
    %281 = arith.mulf %278, %262 : vector<2x32xf32>
    %282 = arith.mulf %277, %279 : vector<2x32xf32>
    %283 = arith.addf %281, %282 : vector<2x32xf32>
    %284 = math.tanh %283 : vector<2x32xf32>
    %285 = arith.mulf %280, %284 : vector<2x32xf32>
    %c6_72 = arith.constant 6 : index
    %c0_73 = arith.constant 0 : index
    %286 = vector.load %arg14[%c6_72, %c0_73] : memref<16x32xf32, #tpu.memory_space<vmem>>, vector<2x32xf32>
    tpu.vector_store %arg14[%c6_72, %c0_73], %285 {strides = array<i32>} : memref<16x32xf32, #tpu.memory_space<vmem>>, vector<2x32xf32>,
    %287 = vector.extract_strided_slice %198 {offsets = [8, 0], sizes = [2, 128], strides = [1, 1]} : vector<16x128xf32> to vector<2x128xf32>
    %288 = arith.truncf %285 : vector<2x32xf32> to vector<2x32xbf16>
    %cst_74 = arith.constant dense<0.000000e+00> : vector<2x128xf32>
    %289 = tpu.matmul %288, %192, %cst_74 {dimension_numbers = #tpu.dot_dimension_numbers<[1], [0], [0], [1], [0, 0, 1, 1], [], []>} : vector<2x32xbf16>, vector<32x128xbf16>, vector<2x128xf32> -> vector<2x128xf32>
    %290 = arith.addf %287, %289 : vector<2x128xf32>
    %291 = math.tanh %290 : vector<2x128xf32>
    %292 = arith.negf %290 : vector<2x128xf32>
    %293 = math.exp %292 : vector<2x128xf32>
    %cst_75 = arith.constant 1.000000e+00 : f32
    %294 = vector.broadcast %cst_75 : f32 to vector<2x128xf32>
    %295 = arith.addf %294, %293 : vector<2x128xf32>
    %296 = arith.divf %294, %295 : vector<2x128xf32>
    %297 = arith.select %5, %291, %296 : vector<2x128xi1>, vector<2x128xf32>
    %298 = vector.extract_strided_slice %297 {offsets = [0, 0], sizes = [2, 32], strides = [1, 1]} : vector<2x128xf32> to vector<2x32xf32>
    %299 = vector.extract_strided_slice %297 {offsets = [0, 32], sizes = [2, 32], strides = [1, 1]} : vector<2x128xf32> to vector<2x32xf32>
    %300 = vector.extract_strided_slice %297 {offsets = [0, 64], sizes = [2, 32], strides = [1, 1]} : vector<2x128xf32> to vector<2x32xf32>
    %301 = vector.extract_strided_slice %297 {offsets = [0, 96], sizes = [2, 32], strides = [1, 1]} : vector<2x128xf32> to vector<2x32xf32>
    %302 = arith.mulf %299, %283 : vector<2x32xf32>
    %303 = arith.mulf %298, %300 : vector<2x32xf32>
    %304 = arith.addf %302, %303 : vector<2x32xf32>
    %305 = math.tanh %304 : vector<2x32xf32>
    %306 = arith.mulf %301, %305 : vector<2x32xf32>
    %c8_76 = arith.constant 8 : index
    %c0_77 = arith.constant 0 : index
    %307 = vector.load %arg14[%c8_76, %c0_77] : memref<16x32xf32, #tpu.memory_space<vmem>>, vector<2x32xf32>
    tpu.vector_store %arg14[%c8_76, %c0_77], %306 {strides = array<i32>} : memref<16x32xf32, #tpu.memory_space<vmem>>, vector<2x32xf32>,
    %308 = vector.extract_strided_slice %198 {offsets = [10, 0], sizes = [2, 128], strides = [1, 1]} : vector<16x128xf32> to vector<2x128xf32>
    %309 = arith.truncf %306 : vector<2x32xf32> to vector<2x32xbf16>
    %cst_78 = arith.constant dense<0.000000e+00> : vector<2x128xf32>
    %310 = tpu.matmul %309, %192, %cst_78 {dimension_numbers = #tpu.dot_dimension_numbers<[1], [0], [0], [1], [0, 0, 1, 1], [], []>} : vector<2x32xbf16>, vector<32x128xbf16>, vector<2x128xf32> -> vector<2x128xf32>
    %311 = arith.addf %308, %310 : vector<2x128xf32>
    %312 = math.tanh %311 : vector<2x128xf32>
    %313 = arith.negf %311 : vector<2x128xf32>
    %314 = math.exp %313 : vector<2x128xf32>
    %cst_79 = arith.constant 1.000000e+00 : f32
    %315 = vector.broadcast %cst_79 : f32 to vector<2x128xf32>
    %316 = arith.addf %315, %314 : vector<2x128xf32>
    %317 = arith.divf %315, %316 : vector<2x128xf32>
    %318 = arith.select %5, %312, %317 : vector<2x128xi1>, vector<2x128xf32>
    %319 = vector.extract_strided_slice %318 {offsets = [0, 0], sizes = [2, 32], strides = [1, 1]} : vector<2x128xf32> to vector<2x32xf32>
    %320 = vector.extract_strided_slice %318 {offsets = [0, 32], sizes = [2, 32], strides = [1, 1]} : vector<2x128xf32> to vector<2x32xf32>
    %321 = vector.extract_strided_slice %318 {offsets = [0, 64], sizes = [2, 32], strides = [1, 1]} : vector<2x128xf32> to vector<2x32xf32>
    %322 = vector.extract_strided_slice %318 {offsets = [0, 96], sizes = [2, 32], strides = [1, 1]} : vector<2x128xf32> to vector<2x32xf32>
    %323 = arith.mulf %320, %304 : vector<2x32xf32>
    %324 = arith.mulf %319, %321 : vector<2x32xf32>
    %325 = arith.addf %323, %324 : vector<2x32xf32>
    %326 = math.tanh %325 : vector<2x32xf32>
    %327 = arith.mulf %322, %326 : vector<2x32xf32>
    %c10_80 = arith.constant 10 : index
    %c0_81 = arith.constant 0 : index
    %328 = vector.load %arg14[%c10_80, %c0_81] : memref<16x32xf32, #tpu.memory_space<vmem>>, vector<2x32xf32>
    tpu.vector_store %arg14[%c10_80, %c0_81], %327 {strides = array<i32>} : memref<16x32xf32, #tpu.memory_space<vmem>>, vector<2x32xf32>,
    %329 = vector.extract_strided_slice %198 {offsets = [12, 0], sizes = [2, 128], strides = [1, 1]} : vector<16x128xf32> to vector<2x128xf32>
    %330 = arith.truncf %327 : vector<2x32xf32> to vector<2x32xbf16>
    %cst_82 = arith.constant dense<0.000000e+00> : vector<2x128xf32>
    %331 = tpu.matmul %330, %192, %cst_82 {dimension_numbers = #tpu.dot_dimension_numbers<[1], [0], [0], [1], [0, 0, 1, 1], [], []>} : vector<2x32xbf16>, vector<32x128xbf16>, vector<2x128xf32> -> vector<2x128xf32>
    %332 = arith.addf %329, %331 : vector<2x128xf32>
    %333 = math.tanh %332 : vector<2x128xf32>
    %334 = arith.negf %332 : vector<2x128xf32>
    %335 = math.exp %334 : vector<2x128xf32>
    %cst_83 = arith.constant 1.000000e+00 : f32
    %336 = vector.broadcast %cst_83 : f32 to vector<2x128xf32>
    %337 = arith.addf %336, %335 : vector<2x128xf32>
    %338 = arith.divf %336, %337 : vector<2x128xf32>
    %339 = arith.select %5, %333, %338 : vector<2x128xi1>, vector<2x128xf32>
    %340 = vector.extract_strided_slice %339 {offsets = [0, 0], sizes = [2, 32], strides = [1, 1]} : vector<2x128xf32> to vector<2x32xf32>
    %341 = vector.extract_strided_slice %339 {offsets = [0, 32], sizes = [2, 32], strides = [1, 1]} : vector<2x128xf32> to vector<2x32xf32>
    %342 = vector.extract_strided_slice %339 {offsets = [0, 64], sizes = [2, 32], strides = [1, 1]} : vector<2x128xf32> to vector<2x32xf32>
    %343 = vector.extract_strided_slice %339 {offsets = [0, 96], sizes = [2, 32], strides = [1, 1]} : vector<2x128xf32> to vector<2x32xf32>
    %344 = arith.mulf %341, %325 : vector<2x32xf32>
    %345 = arith.mulf %340, %342 : vector<2x32xf32>
    %346 = arith.addf %344, %345 : vector<2x32xf32>
    %347 = math.tanh %346 : vector<2x32xf32>
    %348 = arith.mulf %343, %347 : vector<2x32xf32>
    %c12_84 = arith.constant 12 : index
    %c0_85 = arith.constant 0 : index
    %349 = vector.load %arg14[%c12_84, %c0_85] : memref<16x32xf32, #tpu.memory_space<vmem>>, vector<2x32xf32>
    tpu.vector_store %arg14[%c12_84, %c0_85], %348 {strides = array<i32>} : memref<16x32xf32, #tpu.memory_space<vmem>>, vector<2x32xf32>,
    %350 = vector.extract_strided_slice %198 {offsets = [14, 0], sizes = [2, 128], strides = [1, 1]} : vector<16x128xf32> to vector<2x128xf32>
    %351 = arith.truncf %348 : vector<2x32xf32> to vector<2x32xbf16>
    %cst_86 = arith.constant dense<0.000000e+00> : vector<2x128xf32>
    %352 = tpu.matmul %351, %192, %cst_86 {dimension_numbers = #tpu.dot_dimension_numbers<[1], [0], [0], [1], [0, 0, 1, 1], [], []>} : vector<2x32xbf16>, vector<32x128xbf16>, vector<2x128xf32> -> vector<2x128xf32>
    %353 = arith.addf %350, %352 : vector<2x128xf32>
    %354 = math.tanh %353 : vector<2x128xf32>
    %355 = arith.negf %353 : vector<2x128xf32>
    %356 = math.exp %355 : vector<2x128xf32>
    %cst_87 = arith.constant 1.000000e+00 : f32
    %357 = vector.broadcast %cst_87 : f32 to vector<2x128xf32>
    %358 = arith.addf %357, %356 : vector<2x128xf32>
    %359 = arith.divf %357, %358 : vector<2x128xf32>
    %360 = arith.select %5, %354, %359 : vector<2x128xi1>, vector<2x128xf32>
    %361 = vector.extract_strided_slice %360 {offsets = [0, 0], sizes = [2, 32], strides = [1, 1]} : vector<2x128xf32> to vector<2x32xf32>
    %362 = vector.extract_strided_slice %360 {offsets = [0, 32], sizes = [2, 32], strides = [1, 1]} : vector<2x128xf32> to vector<2x32xf32>
    %363 = vector.extract_strided_slice %360 {offsets = [0, 64], sizes = [2, 32], strides = [1, 1]} : vector<2x128xf32> to vector<2x32xf32>
    %364 = vector.extract_strided_slice %360 {offsets = [0, 96], sizes = [2, 32], strides = [1, 1]} : vector<2x128xf32> to vector<2x32xf32>
    %365 = arith.mulf %362, %346 : vector<2x32xf32>
    %366 = arith.mulf %361, %363 : vector<2x32xf32>
    %367 = arith.addf %365, %366 : vector<2x32xf32>
    %368 = math.tanh %367 : vector<2x32xf32>
    %369 = arith.mulf %364, %368 : vector<2x32xf32>
    %c14_88 = arith.constant 14 : index
    %c0_89 = arith.constant 0 : index
    %370 = vector.load %arg14[%c14_88, %c0_89] : memref<16x32xf32, #tpu.memory_space<vmem>>, vector<2x32xf32>
    tpu.vector_store %arg14[%c14_88, %c0_89], %369 {strides = array<i32>} : memref<16x32xf32, #tpu.memory_space<vmem>>, vector<2x32xf32>,
    %c1_90 = arith.constant 1 : index
    %c0_91 = arith.constant 0 : index
    %c0_92 = arith.constant 0 : index
    %371 = vector.load %arg12[%c1_90, %c0_91, %c0_92] : memref<2x2x32xf32, #tpu.memory_space<vmem>>, vector<1x2x32xf32>
    %372 = vector.shape_cast %371 : vector<1x2x32xf32> to vector<2x32xf32>
    %373 = vector.shape_cast %369 : vector<2x32xf32> to vector<1x2x32xf32>
    tpu.vector_store %arg12[%c1_90, %c0_91, %c0_92], %373 {strides = array<i32>} : memref<2x2x32xf32, #tpu.memory_space<vmem>>, vector<1x2x32xf32>,
    %c1_93 = arith.constant 1 : index
    %c0_94 = arith.constant 0 : index
    %c0_95 = arith.constant 0 : index
    %374 = vector.load %arg13[%c1_93, %c0_94, %c0_95] : memref<2x2x32xf32, #tpu.memory_space<vmem>>, vector<1x2x32xf32>
    %375 = vector.shape_cast %374 : vector<1x2x32xf32> to vector<2x32xf32>
    %376 = vector.shape_cast %367 : vector<2x32xf32> to vector<1x2x32xf32>
    tpu.vector_store %arg13[%c1_93, %c0_94, %c0_95], %376 {strides = array<i32>} : memref<2x2x32xf32, #tpu.memory_space<vmem>>, vector<1x2x32xf32>,
    %c0_96 = arith.constant 0 : index
    %c0_97 = arith.constant 0 : index
    %377 = vector.load %arg14[%c0_96, %c0_97] : memref<16x32xf32, #tpu.memory_space<vmem>>, vector<16x32xf32>
    %378 = arith.truncf %377 : vector<16x32xf32> to vector<16x32xbf16>
    %c0_98 = arith.constant 0 : index
    %c0_99 = arith.constant 0 : index
    %379 = vector.load %arg9[%c0_98, %c0_99] : memref<32x128xbf16, #tpu.memory_space<vmem>>, vector<32x128xbf16>
    %cst_100 = arith.constant dense<0.000000e+00> : vector<16x128xf32>
    %380 = tpu.matmul %378, %379, %cst_100 {dimension_numbers = #tpu.dot_dimension_numbers<[1], [0], [0], [1], [0, 0, 1, 1], [], []>} : vector<16x32xbf16>, vector<32x128xbf16>, vector<16x128xf32> -> vector<16x128xf32>
    %c0_101 = arith.constant 0 : index
    %c0_102 = arith.constant 0 : index
    %381 = vector.load %arg10[%c0_101, %c0_102] : memref<1x128xf32, #tpu.memory_space<vmem>>, vector<1x128xf32>
    %382 = vector.broadcast %381 : vector<1x128xf32> to vector<16x128xf32>
    %383 = arith.addf %380, %382 : vector<16x128xf32>
    %c0_103 = arith.constant 0 : index
    %c0_104 = arith.constant 0 : index
    %384 = vector.load %arg11[%c0_103, %c0_104] : memref<16x128xf32, #tpu.memory_space<vmem>>, vector<16x128xf32>
    tpu.vector_store %arg11[%c0_103, %c0_104], %383 {strides = array<i32>} : memref<16x128xf32, #tpu.memory_space<vmem>>, vector<16x128xf32>,
    return
  }
}

</mosaic_0001>

<llo_original>
// kernel: decoder_forward.1
$region0: #{decoder_forward.1}
  #allocation0 [shape = 'u32[]', space=smem, size = 0x4, offset = 0x4, fixed_abs, tag = 'smem constant byte address 0x4 - core index']
  #allocation1 [shape = 'u32[144,128]{1,0:T(1,128)}', space=vmem, size = 0x12000, scoped, tag = 'internal scratch']
  #allocation2 [shape = 'f32[16,32]{1,0:T(8,128)}', space=vmem, size = 0x2000, scoped, tag = 'scratch operand']
  %s0 = inlined_call_operand.vmem [shape: bf16[16,16], index: 0, kind: input, shape index: {}]
  %s1 = inlined_call_operand.vmem [shape: f32[2,2,32], index: 1, kind: input, shape index: {}]
  %s2 = inlined_call_operand.vmem [shape: f32[2,2,32], index: 2, kind: input, shape index: {}]
  %s3 = inlined_call_operand.vmem [shape: bf16[16,128], index: 3, kind: input, shape index: {}]
  %s4 = inlined_call_operand.vmem [shape: bf16[32,128], index: 4, kind: input, shape index: {}]
  %s5 = inlined_call_operand.vmem [shape: f32[1,128], index: 5, kind: input, shape index: {}]
  %s6 = inlined_call_operand.vmem [shape: bf16[32,128], index: 6, kind: input, shape index: {}]
  %s7 = inlined_call_operand.vmem [shape: bf16[32,128], index: 7, kind: input, shape index: {}]
  %s8 = inlined_call_operand.vmem [shape: f32[1,128], index: 8, kind: input, shape index: {}]
  %s9 = inlined_call_operand.vmem [shape: bf16[32,128], index: 9, kind: input, shape index: {}]
  %s10 = inlined_call_operand.vmem [shape: f32[1,128], index: 10, kind: input, shape index: {}]
  %s11 = inlined_call_operand.vmem [shape: f32[16,128], index: 11, kind: output, shape index: {0}]
  %s12 = inlined_call_operand.hbm [shape: f32[2,2,32], index: 12, kind: output, shape index: {1}]
  %s13 = inlined_call_operand.hbm [shape: f32[2,2,32], index: 13, kind: output, shape index: {2}]
  %14 = xla_tuple %s11, %s12, %s13
  %s15 = sld [smem:[#allocation0]]
  $region70: #{decoder_forward.1} parent=0
    _
  %s17 = ssub.s32 1, %s15
  %s18 = scalar_select 0, %s17, %s15
  $region1: #{decoder_forward.1} parent=0
    #allocation3 [shape = 'u8[2048]{0}', space=vmem, size = 0x800, scoped, tag = 'output window, operand 1, single buffered']
    #allocation4 [shape = 's32[1]{0}', space=sflag, size = 0x4, scoped, tag = 'scoped memory for decoder_forward.1']
    #allocation5 [shape = 'u8[2048]{0}', space=vmem, size = 0x800, scoped, tag = 'output window, operand 2, single buffered']
    #allocation6 [shape = 's32[1]{0}', space=sflag, size = 0x4, scoped, tag = 'scoped memory for decoder_forward.1']
    %19 = vsyncpa [#allocation4], 0
    %20 = vsyncpa [#allocation6], 0
    // Predicated region
    $region2: #{decoder_forward.1} parent=1 // pred_check
      _
    $region3: #{decoder_forward.1} parent=1 // pred_check_branch
      %22 = sbr.rel (0) target = $region5
    $region4: #{decoder_forward.1} parent=1 // pred_region
      _
    $region5: #{decoder_forward.1} parent=1 // pred_fallthru
      _
    // Predicated region
    $region6: #{decoder_forward.1} parent=1 // pred_check
      _
    $region7: #{decoder_forward.1} parent=1 // pred_check_branch
      %24 = sbr.rel (0) target = $region9
    $region8: #{decoder_forward.1} parent=1 // pred_region
      _
    $region9: #{decoder_forward.1} parent=1 // pred_fallthru
      _
    // Predicated region
    $region10: #{decoder_forward.1} parent=1 // pred_check
      _
    $region11: #{decoder_forward.1} parent=1 // pred_check_branch
      %26 = sbr.rel (0) target = $region13
    $region12: #{decoder_forward.1} parent=1 // pred_region
      _
    $region13: #{decoder_forward.1} parent=1 // pred_fallthru
      _
    // Predicated region
    $region14: #{decoder_forward.1} parent=1 // pred_check
      _
    $region15: #{decoder_forward.1} parent=1 // pred_check_branch
      %28 = sbr.rel (0) target = $region17
    $region16: #{decoder_forward.1} parent=1 // pred_region
      _
    $region17: #{decoder_forward.1} parent=1 // pred_fallthru
      _
    // Predicated region
    $region18: #{decoder_forward.1} parent=1 // pred_check
      _
    $region19: #{decoder_forward.1} parent=1 // pred_check_branch
      %30 = sbr.rel (0) target = $region21
    $region20: #{decoder_forward.1} parent=1 // pred_region
      _
    $region21: #{decoder_forward.1} parent=1 // pred_fallthru
      _
    // Predicated region
    $region22: #{decoder_forward.1} parent=1 // pred_check
      _
    $region23: #{decoder_forward.1} parent=1 // pred_check_branch
      %32 = sbr.rel (0) target = $region25
    $region24: #{decoder_forward.1} parent=1 // pred_region
      _
    $region25: #{decoder_forward.1} parent=1 // pred_fallthru
      _
    // Predicated region
    $region26: #{decoder_forward.1} parent=1 // pred_check
      _
    $region27: #{decoder_forward.1} parent=1 // pred_check_branch
      %34 = sbr.rel (0) target = $region29
    $region28: #{decoder_forward.1} parent=1 // pred_region
      _
    $region29: #{decoder_forward.1} parent=1 // pred_fallthru
      _
    // Predicated region
    $region30: #{decoder_forward.1} parent=1 // pred_check
      _
    $region31: #{decoder_forward.1} parent=1 // pred_check_branch
      %36 = sbr.rel (0) target = $region33
    $region32: #{decoder_forward.1} parent=1 // pred_region
      _
    $region33: #{decoder_forward.1} parent=1 // pred_fallthru
      _
    // Predicated region
    $region34: #{decoder_forward.1} parent=1 // pred_check
      _
    $region35: #{decoder_forward.1} parent=1 // pred_check_branch
      %38 = sbr.rel (0) target = $region37
    $region36: #{decoder_forward.1} parent=1 // pred_region
      _
    $region37: #{decoder_forward.1} parent=1 // pred_fallthru
      _
    // Predicated region
    $region38: #{decoder_forward.1} parent=1 // pred_check
      _
    $region39: #{decoder_forward.1} parent=1 // pred_check_branch
      %40 = sbr.rel (0) target = $region41
    $region40: #{decoder_forward.1} parent=1 // pred_region
      _
    $region41: #{decoder_forward.1} parent=1 // pred_fallthru
      _
    // Predicated region
    $region42: #{decoder_forward.1} parent=1 // pred_check
      _
    $region43: #{decoder_forward.1} parent=1 // pred_check_branch
      %42 = sbr.rel (0) target = $region45
    $region44: #{decoder_forward.1} parent=1 // pred_region
      _
    $region45: #{decoder_forward.1} parent=1 // pred_fallthru
      _
    %v44 = vlaneseq
    %v45 = vand.u32 %v44, 127
    %vm46 = vcmp.ge.s32.totalorder %v45, 64
    %vm47 = vcmp.lt.s32.totalorder %v45, 96
    %vm48 = vmand %vm46, %vm47
    %v49 = vld [vmem:[%s3] sm:$0xf]
    %v50 = vld [vmem:[%s3 + $0x4] sm:$0xf]
    %v51 = vld [vmem:[%s4] sm:$0xf]
    %v52 = vld [vmem:[%s4 + $0x4] sm:$0xf]
    %v53 = vld [vmem:[%s4 + $0x8] sm:$0xf]
    %v54 = vld [vmem:[%s4 + $0xc] sm:$0xf]
    %v55 = vld [vmem:[%s5] sm:$0x1]
    %v56 = vld [vmem:[%s0] sm:$0xf]
    %v57 = vld [vmem:[%s0 + $0x4] sm:$0xf]
    %v59 = vlaneseq
    %v60 = vshrl.u32 %v59, 7
    %v61 = vsub.s32 0, %v60
    %v62 = vrot.slane %v55, %v61
    %v66 = vunpack.c.l.b16 %v56
    %v67 = vunpack.c.l.b16 %v57
    %v68 = vpack.c.b16 %v67, %v66
    %v71 = vunpack.c.l.b16 %v49
    %v72 = vunpack.c.l.b16 %v50
    %v73 = vpack.c.b16 %v72, %v71
    %vm75 = vcmask 130048
    %v77 = vsel %vm75, %v68, 0
    %79 = vmatprep.subr.bf16.mxu0 0
    %80 = vmatpush1.bf16.msra.mxu0 0
    %81 = vmatprep.subr.bf16.mxu0 0
    %82 = vmatpush1.bf16.msra.mxu0 0
    %83 = vmatprep.subr.bf16.mxu0 0
    %84 = vmatpush1.bf16.msra.mxu0 0
    %85 = vmatprep.subr.bf16.mxu0 0
    %86 = vmatpush1.bf16.msra.mxu0 0
    %87 = vmatprep.subr.bf16.mxu0 0
    %88 = vmatpush1.bf16.msra.mxu0 0
    %89 = vmatprep.subr.bf16.mxu0 0
    %90 = vmatpush1.bf16.msra.mxu0 0
    %91 = vmatprep.subr.bf16.mxu0 0
    %92 = vmatpush1.bf16.msra.mxu0 0
    %93 = vmatprep.subr.bf16.mxu0 0
    %94 = vmatpush1.bf16.msra.mxu0 %v73
    %95 = vmatprep.subr.bf16.mxu0 0
    %96 = vmatpush2.bf16.msra.mxu0 0
    %97 = vmatprep.subr.bf16.mxu0 0
    %98 = vmatpush2.bf16.msra.mxu0 0
    %99 = vmatprep.subr.bf16.mxu0 0
    %100 = vmatpush2.bf16.msra.mxu0 0
    %101 = vmatprep.subr.bf16.mxu0 0
    %102 = vmatpush2.bf16.msra.mxu0 0
    %103 = vmatprep.subr.bf16.mxu0 0
    %104 = vmatpush2.bf16.msra.mxu0 0
    %105 = vmatprep.subr.bf16.mxu0 0
    %106 = vmatpush2.bf16.msra.mxu0 0
    %107 = vmatprep.subr.bf16.mxu0 0
    %108 = vmatpush2.bf16.msra.mxu0 0
    %109 = vmatprep.subr.bf16.mxu0 0
    %110 = vmatpush2.bf16.msra.mxu0 0
    %111 = vmatprep.mubr.bf16.mxu0 0
    %112 = vmatmul.mubr.bf16.gmra.mxu0 %v77
    %v113 = vpop.f32.mrf.mxu0
    %v114 = vadd.f32 %v62, %v113
    %v115 = vpop.f32.mrf.mxu0
    %v116 = vpop.f32.mrf.mxu0
    %v117 = vadd.f32 %v62, %v116
    %v118 = vpop.f32.mrf.mxu0
    %119 = vdwg.mxu0
    %v120 = vld [vmem:[%s1] sm:$0x3]
    %v121 = vld [vmem:[%s2] sm:$0x3]
    %v122 = vpack.c.bf16 %v120, %v120
    %v127 = vunpack.c.l.b16 %v51
    %v128 = vunpack.c.l.b16 %v52
    %v129 = vunpack.c.l.b16 %v53
    %v130 = vunpack.c.l.b16 %v54
    %v131 = vpack.c.b16 %v128, %v127
    %v132 = vpack.c.b16 %v130, %v129
    %vm135 = vcmask 261120
    %v137 = vsel %vm135, %v122, 0
    %139 = vmatprep.subr.bf16.mxu0 0
    %140 = vmatpush1.bf16.msra.mxu0 0
    %141 = vmatprep.subr.bf16.mxu0 0
    %142 = vmatpush1.bf16.msra.mxu0 0
    %143 = vmatprep.subr.bf16.mxu0 0
    %144 = vmatpush1.bf16.msra.mxu0 0
    %145 = vmatprep.subr.bf16.mxu0 0
    %146 = vmatpush1.bf16.msra.mxu0 0
    %147 = vmatprep.subr.bf16.mxu0 0
    %148 = vmatpush1.bf16.msra.mxu0 0
    %149 = vmatprep.subr.bf16.mxu0 0
    %150 = vmatpush1.bf16.msra.mxu0 0
    %151 = vmatprep.subr.bf16.mxu0 0
    %152 = vmatpush1.bf16.msra.mxu0 %v132
    %153 = vmatprep.subr.bf16.mxu0 0
    %154 = vmatpush1.bf16.msra.mxu0 %v131
    %155 = vmatprep.subr.bf16.mxu0 0
    %156 = vmatpush2.bf16.msra.mxu0 0
    %157 = vmatprep.subr.bf16.mxu0 0
    %158 = vmatpush2.bf16.msra.mxu0 0
    %159 = vmatprep.subr.bf16.mxu0 0
    %160 = vmatpush2.bf16.msra.mxu0 0
    %161 = vmatprep.subr.bf16.mxu0 0
    %162 = vmatpush2.bf16.msra.mxu0 0
    %163 = vmatprep.subr.bf16.mxu0 0
    %164 = vmatpush2.bf16.msra.mxu0 0
    %165 = vmatprep.subr.bf16.mxu0 0
    %166 = vmatpush2.bf16.msra.mxu0 0
    %167 = vmatprep.subr.bf16.mxu0 0
    %168 = vmatpush2.bf16.msra.mxu0 0
    %169 = vmatprep.subr.bf16.mxu0 0
    %170 = vmatpush2.bf16.msra.mxu0 0
    %171 = vmatprep.mubr.bf16.mxu0 0
    %172 = vmatmul.mubr.bf16.gmra.mxu0 %v137
    %v173 = vpop.f32.mrf.mxu0
    %v174 = vadd.f32 0.0, %v173
    %v175 = vpop.f32.mrf.mxu0
    %v176 = vpop.f32.mrf.mxu0
    %v177 = vpop.f32.mrf.mxu0
    %178 = vdwg.mxu0
    %v179 = vadd.f32 %v114, %v174
    %v180 = vtanh.pop %v179
    %v181 = vxor.u32 %v179, 2147483648
    %v182 = vmul.f32 %v181, 1.442695
    %v183 = vpow.pop %v182
    %v184 = vadd.f32 %v183, 1.0
    %v185 = vrcp.pop %v184
    %v186 = vmul.f32 1.0, %v185
    %v187 = vsel %vm48, %v180, %v186
    %189 = vrot.lane.b32.xlu0 %v121, 32
    %v190 = vpop.permute.xlu0 %189
    %v192 = vmul.f32 %v187, %v190
    %194 = vrot.lane.b32.xlu0 %v187, 64
    %v195 = vpop.permute.xlu0 %194
    %v197 = vmul.f32 %v187, %v195
    %199 = vrot.lane.b32.xlu0 %v197, 32
    %v200 = vpop.permute.xlu0 %199
    %v202 = vadd.f32 %v192, %v200
    %v203 = vtanh.pop %v202
    %205 = vrot.lane.b32.xlu0 %v203, 64
    %v206 = vpop.permute.xlu0 %205
    %v208 = vmul.f32 %v187, %v206
    %210 = vrot.lane.b32.xlu0 %v208, 32
    %v211 = vpop.permute.xlu0 %210
    %vm213 = vcmask 254976
    %214 = vst.msk [vmem:[#allocation2] sm:$0x3] %vm213, %v211
    %v215 = vpack.c.bf16 %v208, %v208
    %217 = vrot.lane.b32.xlu0 %v215, 32
    %v218 = vpop.permute.xlu0 %217
    %v220 = vsel %vm135, %v218, 0
    %222 = vmatprep.subr.bf16.mxu0 0
    %223 = vmatpush1.bf16.msra.mxu0 0
    %224 = vmatprep.subr.bf16.mxu0 0
    %225 = vmatpush1.bf16.msra.mxu0 0
    %226 = vmatprep.subr.bf16.mxu0 0
    %227 = vmatpush1.bf16.msra.mxu0 0
    %228 = vmatprep.subr.bf16.mxu0 0
    %229 = vmatpush1.bf16.msra.mxu0 0
    %230 = vmatprep.subr.bf16.mxu0 0
    %231 = vmatpush1.bf16.msra.mxu0 0
    %232 = vmatprep.subr.bf16.mxu0 0
    %233 = vmatpush1.bf16.msra.mxu0 0
    %234 = vmatprep.subr.bf16.mxu0 0
    %235 = vmatpush1.bf16.msra.mxu0 %v132
    %236 = vmatprep.subr.bf16.mxu0 0
    %237 = vmatpush1.bf16.msra.mxu0 %v131
    %238 = vmatprep.subr.bf16.mxu0 0
    %239 = vmatpush2.bf16.msra.mxu0 0
    %240 = vmatprep.subr.bf16.mxu0 0
    %241 = vmatpush2.bf16.msra.mxu0 0
    %242 = vmatprep.subr.bf16.mxu0 0
    %243 = vmatpush2.bf16.msra.mxu0 0
    %244 = vmatprep.subr.bf16.mxu0 0
    %245 = vmatpush2.bf16.msra.mxu0 0
    %246 = vmatprep.subr.bf16.mxu0 0
    %247 = vmatpush2.bf16.msra.mxu0 0
    %248 = vmatprep.subr.bf16.mxu0 0
    %249 = vmatpush2.bf16.msra.mxu0 0
    %250 = vmatprep.subr.bf16.mxu0 0
    %251 = vmatpush2.bf16.msra.mxu0 0
    %252 = vmatprep.subr.bf16.mxu0 0
    %253 = vmatpush2.bf16.msra.mxu0 0
    %254 = vmatprep.mubr.bf16.mxu0 0
    %255 = vmatmul.mubr.bf16.gmra.mxu0 %v220
    %v256 = vpop.f32.mrf.mxu0
    %v257 = vadd.f32 0.0, %v256
    %v258 = vpop.f32.mrf.mxu0
    %v259 = vpop.f32.mrf.mxu0
    %v260 = vpop.f32.mrf.mxu0
    %261 = vdwg.mxu0
    %v263 = vrot.slane %v257, 6
    %v265 = vadd.f32 %v114, %v263
    %v266 = vtanh.pop %v265
    %v267 = vxor.u32 %v265, 2147483648
    %v268 = vmul.f32 %v267, 1.442695
    %v269 = vpow.pop %v268
    %v270 = vadd.f32 %v269, 1.0
    %v271 = vrcp.pop %v270
    %v272 = vmul.f32 1.0, %v271
    %v273 = vsel %vm48, %v266, %v272
    %v275 = vrot.slane %v202, 6
    %v277 = vmul.f32 %v273, %v275
    %279 = vrot.lane.b32.xlu0 %v273, 64
    %v280 = vpop.permute.xlu0 %279
    %v282 = vmul.f32 %v273, %v280
    %284 = vrot.lane.b32.xlu0 %v282, 32
    %v285 = vpop.permute.xlu0 %284
    %v287 = vadd.f32 %v277, %v285
    %v288 = vtanh.pop %v287
    %290 = vrot.lane.b32.xlu0 %v288, 64
    %v291 = vpop.permute.xlu0 %290
    %v293 = vmul.f32 %v273, %v291
    %295 = vrot.lane.b32.xlu0 %v293, 32
    %v296 = vpop.permute.xlu0 %295
    %vm298 = vcmask 257026
    %299 = vst.msk [vmem:[#allocation2] sm:$0xc] %vm298, %v296
    %v300 = vpack.c.bf16 %v293, %v293
    %v302 = vrot.slane %v300, 1
    %303 = vrot.lane.b32.xlu0 %v302, 32
    %v304 = vpop.permute.xlu0 %303
    %v306 = vsel %vm135, %v304, 0
    %308 = vmatprep.subr.bf16.mxu0 0
    %309 = vmatpush1.bf16.msra.mxu0 0
    %310 = vmatprep.subr.bf16.mxu0 0
    %311 = vmatpush1.bf16.msra.mxu0 0
    %312 = vmatprep.subr.bf16.mxu0 0
    %313 = vmatpush1.bf16.msra.mxu0 0
    %314 = vmatprep.subr.bf16.mxu0 0
    %315 = vmatpush1.bf16.msra.mxu0 0
    %316 = vmatprep.subr.bf16.mxu0 0
    %317 = vmatpush1.bf16.msra.mxu0 0
    %318 = vmatprep.subr.bf16.mxu0 0
    %319 = vmatpush1.bf16.msra.mxu0 0
    %320 = vmatprep.subr.bf16.mxu0 0
    %321 = vmatpush1.bf16.msra.mxu0 %v132
    %322 = vmatprep.subr.bf16.mxu0 0
    %323 = vmatpush1.bf16.msra.mxu0 %v131
    %324 = vmatprep.subr.bf16.mxu0 0
    %325 = vmatpush2.bf16.msra.mxu0 0
    %326 = vmatprep.subr.bf16.mxu0 0
    %327 = vmatpush2.bf16.msra.mxu0 0
    %328 = vmatprep.subr.bf16.mxu0 0
    %329 = vmatpush2.bf16.msra.mxu0 0
    %330 = vmatprep.subr.bf16.mxu0 0
    %331 = vmatpush2.bf16.msra.mxu0 0
    %332 = vmatprep.subr.bf16.mxu0 0
    %333 = vmatpush2.bf16.msra.mxu0 0
    %334 = vmatprep.subr.bf16.mxu0 0
    %335 = vmatpush2.bf16.msra.mxu0 0
    %336 = vmatprep.subr.bf16.mxu0 0
    %337 = vmatpush2.bf16.msra.mxu0 0
    %338 = vmatprep.subr.bf16.mxu0 0
    %339 = vmatpush2.bf16.msra.mxu0 0
    %340 = vmatprep.mubr.bf16.mxu0 0
    %341 = vmatmul.mubr.bf16.gmra.mxu0 %v306
    %v342 = vpop.f32.mrf.mxu0
    %v343 = vadd.f32 0.0, %v342
    %v344 = vpop.f32.mrf.mxu0
    %v345 = vpop.f32.mrf.mxu0
    %v346 = vpop.f32.mrf.mxu0
    %347 = vdwg.mxu0
    %v349 = vrot.slane %v343, 4
    %v351 = vadd.f32 %v114, %v349
    %v352 = vtanh.pop %v351
    %v353 = vxor.u32 %v351, 2147483648
    %v354 = vmul.f32 %v353, 1.442695
    %v355 = vpow.pop %v354
    %v356 = vadd.f32 %v355, 1.0
    %v357 = vrcp.pop %v356
    %v358 = vmul.f32 1.0, %v357
    %v359 = vsel %vm48, %v352, %v358
    %v361 = vrot.slane %v287, 6
    %v363 = vmul.f32 %v359, %v361
    %365 = vrot.lane.b32.xlu0 %v359, 64
    %v366 = vpop.permute.xlu0 %365
    %v368 = vmul.f32 %v359, %v366
    %370 = vrot.lane.b32.xlu0 %v368, 32
    %v371 = vpop.permute.xlu0 %370
    %v373 = vadd.f32 %v363, %v371
    %v374 = vtanh.pop %v373
    %376 = vrot.lane.b32.xlu0 %v374, 64
    %v377 = vpop.permute.xlu0 %376
    %v379 = vmul.f32 %v359, %v377
    %381 = vrot.lane.b32.xlu0 %v379, 32
    %v382 = vpop.permute.xlu0 %381
    %vm384 = vcmask 259076
    %385 = vst.msk [vmem:[#allocation2] sm:$0x30] %vm384, %v382
    %v386 = vpack.c.bf16 %v379, %v379
    %v388 = vrot.slane %v386, 2
    %389 = vrot.lane.b32.xlu0 %v388, 32
    %v390 = vpop.permute.xlu0 %389
    %v392 = vsel %vm135, %v390, 0
    %394 = vmatprep.subr.bf16.mxu0 0
    %395 = vmatpush1.bf16.msra.mxu0 0
    %396 = vmatprep.subr.bf16.mxu0 0
    %397 = vmatpush1.bf16.msra.mxu0 0
    %398 = vmatprep.subr.bf16.mxu0 0
    %399 = vmatpush1.bf16.msra.mxu0 0
    %400 = vmatprep.subr.bf16.mxu0 0
    %401 = vmatpush1.bf16.msra.mxu0 0
    %402 = vmatprep.subr.bf16.mxu0 0
    %403 = vmatpush1.bf16.msra.mxu0 0
    %404 = vmatprep.subr.bf16.mxu0 0
    %405 = vmatpush1.bf16.msra.mxu0 0
    %406 = vmatprep.subr.bf16.mxu0 0
    %407 = vmatpush1.bf16.msra.mxu0 %v132
    %408 = vmatprep.subr.bf16.mxu0 0
    %409 = vmatpush1.bf16.msra.mxu0 %v131
    %410 = vmatprep.subr.bf16.mxu0 0
    %411 = vmatpush2.bf16.msra.mxu0 0
    %412 = vmatprep.subr.bf16.mxu0 0
    %413 = vmatpush2.bf16.msra.mxu0 0
    %414 = vmatprep.subr.bf16.mxu0 0
    %415 = vmatpush2.bf16.msra.mxu0 0
    %416 = vmatprep.subr.bf16.mxu0 0
    %417 = vmatpush2.bf16.msra.mxu0 0
    %418 = vmatprep.subr.bf16.mxu0 0
    %419 = vmatpush2.bf16.msra.mxu0 0
    %420 = vmatprep.subr.bf16.mxu0 0
    %421 = vmatpush2.bf16.msra.mxu0 0
    %422 = vmatprep.subr.bf16.mxu0 0
    %423 = vmatpush2.bf16.msra.mxu0 0
    %424 = vmatprep.subr.bf16.mxu0 0
    %425 = vmatpush2.bf16.msra.mxu0 0
    %426 = vmatprep.mubr.bf16.mxu0 0
    %427 = vmatmul.mubr.bf16.gmra.mxu0 %v392
    %v428 = vpop.f32.mrf.mxu0
    %v429 = vadd.f32 0.0, %v428
    %v430 = vpop.f32.mrf.mxu0
    %v431 = vpop.f32.mrf.mxu0
    %v432 = vpop.f32.mrf.mxu0
    %433 = vdwg.mxu0
    %v435 = vrot.slane %v429, 2
    %v437 = vadd.f32 %v114, %v435
    %v438 = vtanh.pop %v437
    %v439 = vxor.u32 %v437, 2147483648
    %v440 = vmul.f32 %v439, 1.442695
    %v441 = vpow.pop %v440
    %v442 = vadd.f32 %v441, 1.0
    %v443 = vrcp.pop %v442
    %v444 = vmul.f32 1.0, %v443
    %v445 = vsel %vm48, %v438, %v444
    %v447 = vrot.slane %v373, 6
    %v449 = vmul.f32 %v445, %v447
    %451 = vrot.lane.b32.xlu0 %v445, 64
    %v452 = vpop.permute.xlu0 %451
    %v454 = vmul.f32 %v445, %v452
    %456 = vrot.lane.b32.xlu0 %v454, 32
    %v457 = vpop.permute.xlu0 %456
    %v459 = vadd.f32 %v449, %v457
    %v460 = vtanh.pop %v459
    %462 = vrot.lane.b32.xlu0 %v460, 64
    %v463 = vpop.permute.xlu0 %462
    %v465 = vmul.f32 %v445, %v463
    %467 = vrot.lane.b32.xlu0 %v465, 32
    %v468 = vpop.permute.xlu0 %467
    %vm470 = vcmask 261126
    %471 = vst.msk [vmem:[#allocation2] sm:$0xc0] %vm470, %v468
    %v472 = vpack.c.bf16 %v465, %v465
    %v474 = vrot.slane %v472, 3
    %475 = vrot.lane.b32.xlu0 %v474, 32
    %v476 = vpop.permute.xlu0 %475
    %v478 = vsel %vm135, %v476, 0
    %480 = vmatprep.subr.bf16.mxu0 0
    %481 = vmatpush1.bf16.msra.mxu0 0
    %482 = vmatprep.subr.bf16.mxu0 0
    %483 = vmatpush1.bf16.msra.mxu0 0
    %484 = vmatprep.subr.bf16.mxu0 0
    %485 = vmatpush1.bf16.msra.mxu0 0
    %486 = vmatprep.subr.bf16.mxu0 0
    %487 = vmatpush1.bf16.msra.mxu0 0
    %488 = vmatprep.subr.bf16.mxu0 0
    %489 = vmatpush1.bf16.msra.mxu0 0
    %490 = vmatprep.subr.bf16.mxu0 0
    %491 = vmatpush1.bf16.msra.mxu0 0
    %492 = vmatprep.subr.bf16.mxu0 0
    %493 = vmatpush1.bf16.msra.mxu0 %v132
    %494 = vmatprep.subr.bf16.mxu0 0
    %495 = vmatpush1.bf16.msra.mxu0 %v131
    %496 = vmatprep.subr.bf16.mxu0 0
    %497 = vmatpush2.bf16.msra.mxu0 0
    %498 = vmatprep.subr.bf16.mxu0 0
    %499 = vmatpush2.bf16.msra.mxu0 0
    %500 = vmatprep.subr.bf16.mxu0 0
    %501 = vmatpush2.bf16.msra.mxu0 0
    %502 = vmatprep.subr.bf16.mxu0 0
    %503 = vmatpush2.bf16.msra.mxu0 0
    %504 = vmatprep.subr.bf16.mxu0 0
    %505 = vmatpush2.bf16.msra.mxu0 0
    %506 = vmatprep.subr.bf16.mxu0 0
    %507 = vmatpush2.bf16.msra.mxu0 0
    %508 = vmatprep.subr.bf16.mxu0 0
    %509 = vmatpush2.bf16.msra.mxu0 0
    %510 = vmatprep.subr.bf16.mxu0 0
    %511 = vmatpush2.bf16.msra.mxu0 0
    %512 = vmatprep.mubr.bf16.mxu0 0
    %513 = vmatmul.mubr.bf16.gmra.mxu0 %v478
    %v514 = vpop.f32.mrf.mxu0
    %v515 = vadd.f32 0.0, %v514
    %v516 = vpop.f32.mrf.mxu0
    %v517 = vpop.f32.mrf.mxu0
    %v518 = vpop.f32.mrf.mxu0
    %519 = vdwg.mxu0
    %v520 = vadd.f32 %v117, %v515
    %v521 = vtanh.pop %v520
    %v522 = vxor.u32 %v520, 2147483648
    %v523 = vmul.f32 %v522, 1.442695
    %v524 = vpow.pop %v523
    %v525 = vadd.f32 %v524, 1.0
    %v526 = vrcp.pop %v525
    %v527 = vmul.f32 1.0, %v526
    %v528 = vsel %vm48, %v521, %v527
    %v530 = vrot.slane %v459, 6
    %v532 = vmul.f32 %v528, %v530
    %534 = vrot.lane.b32.xlu0 %v528, 64
    %v535 = vpop.permute.xlu0 %534
    %v537 = vmul.f32 %v528, %v535
    %539 = vrot.lane.b32.xlu0 %v537, 32
    %v540 = vpop.permute.xlu0 %539
    %v542 = vadd.f32 %v532, %v540
    %v543 = vtanh.pop %v542
    %545 = vrot.lane.b32.xlu0 %v543, 64
    %v546 = vpop.permute.xlu0 %545
    %v548 = vmul.f32 %v528, %v546
    %550 = vrot.lane.b32.xlu0 %v548, 32
    %v551 = vpop.permute.xlu0 %550
    %553 = vst.msk [vmem:[#allocation2 + $0x8] sm:$0x3] %vm213, %v551
    %v554 = vpack.c.bf16 %v548, %v548
    %556 = vrot.lane.b32.xlu0 %v554, 32
    %v557 = vpop.permute.xlu0 %556
    %v559 = vsel %vm135, %v557, 0
    %561 = vmatprep.subr.bf16.mxu0 0
    %562 = vmatpush1.bf16.msra.mxu0 0
    %563 = vmatprep.subr.bf16.mxu0 0
    %564 = vmatpush1.bf16.msra.mxu0 0
    %565 = vmatprep.subr.bf16.mxu0 0
    %566 = vmatpush1.bf16.msra.mxu0 0
    %567 = vmatprep.subr.bf16.mxu0 0
    %568 = vmatpush1.bf16.msra.mxu0 0
    %569 = vmatprep.subr.bf16.mxu0 0
    %570 = vmatpush1.bf16.msra.mxu0 0
    %571 = vmatprep.subr.bf16.mxu0 0
    %572 = vmatpush1.bf16.msra.mxu0 0
    %573 = vmatprep.subr.bf16.mxu0 0
    %574 = vmatpush1.bf16.msra.mxu0 %v132
    %575 = vmatprep.subr.bf16.mxu0 0
    %576 = vmatpush1.bf16.msra.mxu0 %v131
    %577 = vmatprep.subr.bf16.mxu0 0
    %578 = vmatpush2.bf16.msra.mxu0 0
    %579 = vmatprep.subr.bf16.mxu0 0
    %580 = vmatpush2.bf16.msra.mxu0 0
    %581 = vmatprep.subr.bf16.mxu0 0
    %582 = vmatpush2.bf16.msra.mxu0 0
    %583 = vmatprep.subr.bf16.mxu0 0
    %584 = vmatpush2.bf16.msra.mxu0 0
    %585 = vmatprep.subr.bf16.mxu0 0
    %586 = vmatpush2.bf16.msra.mxu0 0
    %587 = vmatprep.subr.bf16.mxu0 0
    %588 = vmatpush2.bf16.msra.mxu0 0
    %589 = vmatprep.subr.bf16.mxu0 0
    %590 = vmatpush2.bf16.msra.mxu0 0
    %591 = vmatprep.subr.bf16.mxu0 0
    %592 = vmatpush2.bf16.msra.mxu0 0
    %593 = vmatprep.mubr.bf16.mxu0 0
    %594 = vmatmul.mubr.bf16.gmra.mxu0 %v559
    %v595 = vpop.f32.mrf.mxu0
    %v596 = vadd.f32 0.0, %v595
    %v597 = vpop.f32.mrf.mxu0
    %v598 = vpop.f32.mrf.mxu0
    %v599 = vpop.f32.mrf.mxu0
    %600 = vdwg.mxu0
    %v602 = vrot.slane %v596, 6
    %v604 = vadd.f32 %v117, %v602
    %v605 = vtanh.pop %v604
    %v606 = vxor.u32 %v604, 2147483648
    %v607 = vmul.f32 %v606, 1.442695
    %v608 = vpow.pop %v607
    %v609 = vadd.f32 %v608, 1.0
    %v610 = vrcp.pop %v609
    %v611 = vmul.f32 1.0, %v610
    %v612 = vsel %vm48, %v605, %v611
    %v614 = vrot.slane %v542, 6
    %v616 = vmul.f32 %v612, %v614
    %618 = vrot.lane.b32.xlu0 %v612, 64
    %v619 = vpop.permute.xlu0 %618
    %v621 = vmul.f32 %v612, %v619
    %623 = vrot.lane.b32.xlu0 %v621, 32
    %v624 = vpop.permute.xlu0 %623
    %v626 = vadd.f32 %v616, %v624
    %v627 = vtanh.pop %v626
    %629 = vrot.lane.b32.xlu0 %v627, 64
    %v630 = vpop.permute.xlu0 %629
    %v632 = vmul.f32 %v612, %v630
    %634 = vrot.lane.b32.xlu0 %v632, 32
    %v635 = vpop.permute.xlu0 %634
    %637 = vst.msk [vmem:[#allocation2 + $0x8] sm:$0xc] %vm298, %v635
    %v638 = vpack.c.bf16 %v632, %v632
    %v640 = vrot.slane %v638, 1
    %641 = vrot.lane.b32.xlu0 %v640, 32
    %v642 = vpop.permute.xlu0 %641
    %v644 = vsel %vm135, %v642, 0
    %646 = vmatprep.subr.bf16.mxu0 0
    %647 = vmatpush1.bf16.msra.mxu0 0
    %648 = vmatprep.subr.bf16.mxu0 0
    %649 = vmatpush1.bf16.msra.mxu0 0
    %650 = vmatprep.subr.bf16.mxu0 0
    %651 = vmatpush1.bf16.msra.mxu0 0
    %652 = vmatprep.subr.bf16.mxu0 0
    %653 = vmatpush1.bf16.msra.mxu0 0
    %654 = vmatprep.subr.bf16.mxu0 0
    %655 = vmatpush1.bf16.msra.mxu0 0
    %656 = vmatprep.subr.bf16.mxu0 0
    %657 = vmatpush1.bf16.msra.mxu0 0
    %658 = vmatprep.subr.bf16.mxu0 0
    %659 = vmatpush1.bf16.msra.mxu0 %v132
    %660 = vmatprep.subr.bf16.mxu0 0
    %661 = vmatpush1.bf16.msra.mxu0 %v131
    %662 = vmatprep.subr.bf16.mxu0 0
    %663 = vmatpush2.bf16.msra.mxu0 0
    %664 = vmatprep.subr.bf16.mxu0 0
    %665 = vmatpush2.bf16.msra.mxu0 0
    %666 = vmatprep.subr.bf16.mxu0 0
    %667 = vmatpush2.bf16.msra.mxu0 0
    %668 = vmatprep.subr.bf16.mxu0 0
    %669 = vmatpush2.bf16.msra.mxu0 0
    %670 = vmatprep.subr.bf16.mxu0 0
    %671 = vmatpush2.bf16.msra.mxu0 0
    %672 = vmatprep.subr.bf16.mxu0 0
    %673 = vmatpush2.bf16.msra.mxu0 0
    %674 = vmatprep.subr.bf16.mxu0 0
    %675 = vmatpush2.bf16.msra.mxu0 0
    %676 = vmatprep.subr.bf16.mxu0 0
    %677 = vmatpush2.bf16.msra.mxu0 0
    %678 = vmatprep.mubr.bf16.mxu0 0
    %679 = vmatmul.mubr.bf16.gmra.mxu0 %v644
    %v680 = vpop.f32.mrf.mxu0
    %v681 = vadd.f32 0.0, %v680
    %v682 = vpop.f32.mrf.mxu0
    %v683 = vpop.f32.mrf.mxu0
    %v684 = vpop.f32.mrf.mxu0
    %685 = vdwg.mxu0
    %v687 = vrot.slane %v681, 4
    %v689 = vadd.f32 %v117, %v687
    %v690 = vtanh.pop %v689
    %v691 = vxor.u32 %v689, 2147483648
    %v692 = vmul.f32 %v691, 1.442695
    %v693 = vpow.pop %v692
    %v694 = vadd.f32 %v693, 1.0
    %v695 = vrcp.pop %v694
    %v696 = vmul.f32 1.0, %v695
    %v697 = vsel %vm48, %v690, %v696
    %v699 = vrot.slane %v626, 6
    %v701 = vmul.f32 %v697, %v699
    %703 = vrot.lane.b32.xlu0 %v697, 64
    %v704 = vpop.permute.xlu0 %703
    %v706 = vmul.f32 %v697, %v704
    %708 = vrot.lane.b32.xlu0 %v706, 32
    %v709 = vpop.permute.xlu0 %708
    %v711 = vadd.f32 %v701, %v709
    %v712 = vtanh.pop %v711
    %714 = vrot.lane.b32.xlu0 %v712, 64
    %v715 = vpop.permute.xlu0 %714
    %v717 = vmul.f32 %v697, %v715
    %719 = vrot.lane.b32.xlu0 %v717, 32
    %v720 = vpop.permute.xlu0 %719
    %722 = vst.msk [vmem:[#allocation2 + $0x8] sm:$0x30] %vm384, %v720
    %v723 = vpack.c.bf16 %v717, %v717
    %v725 = vrot.slane %v723, 2
    %726 = vrot.lane.b32.xlu0 %v725, 32
    %v727 = vpop.permute.xlu0 %726
    %v729 = vsel %vm135, %v727, 0
    %731 = vmatprep.subr.bf16.mxu0 0
    %732 = vmatpush1.bf16.msra.mxu0 0
    %733 = vmatprep.subr.bf16.mxu0 0
    %734 = vmatpush1.bf16.msra.mxu0 0
    %735 = vmatprep.subr.bf16.mxu0 0
    %736 = vmatpush1.bf16.msra.mxu0 0
    %737 = vmatprep.subr.bf16.mxu0 0
    %738 = vmatpush1.bf16.msra.mxu0 0
    %739 = vmatprep.subr.bf16.mxu0 0
    %740 = vmatpush1.bf16.msra.mxu0 0
    %741 = vmatprep.subr.bf16.mxu0 0
    %742 = vmatpush1.bf16.msra.mxu0 0
    %743 = vmatprep.subr.bf16.mxu0 0
    %744 = vmatpush1.bf16.msra.mxu0 %v132
    %745 = vmatprep.subr.bf16.mxu0 0
    %746 = vmatpush1.bf16.msra.mxu0 %v131
    %747 = vmatprep.subr.bf16.mxu0 0
    %748 = vmatpush2.bf16.msra.mxu0 0
    %749 = vmatprep.subr.bf16.mxu0 0
    %750 = vmatpush2.bf16.msra.mxu0 0
    %751 = vmatprep.subr.bf16.mxu0 0
    %752 = vmatpush2.bf16.msra.mxu0 0
    %753 = vmatprep.subr.bf16.mxu0 0
    %754 = vmatpush2.bf16.msra.mxu0 0
    %755 = vmatprep.subr.bf16.mxu0 0
    %756 = vmatpush2.bf16.msra.mxu0 0
    %757 = vmatprep.subr.bf16.mxu0 0
    %758 = vmatpush2.bf16.msra.mxu0 0
    %759 = vmatprep.subr.bf16.mxu0 0
    %760 = vmatpush2.bf16.msra.mxu0 0
    %761 = vmatprep.subr.bf16.mxu0 0
    %762 = vmatpush2.bf16.msra.mxu0 0
    %763 = vmatprep.mubr.bf16.mxu0 0
    %764 = vmatmul.mubr.bf16.gmra.mxu0 %v729
    %v765 = vpop.f32.mrf.mxu0
    %v766 = vadd.f32 0.0, %v765
    %v767 = vpop.f32.mrf.mxu0
    %v768 = vpop.f32.mrf.mxu0
    %v769 = vpop.f32.mrf.mxu0
    %770 = vdwg.mxu0
    %v772 = vrot.slane %v766, 2
    %v774 = vadd.f32 %v117, %v772
    %v775 = vtanh.pop %v774
    %v776 = vxor.u32 %v774, 2147483648
    %v777 = vmul.f32 %v776, 1.442695
    %v778 = vpow.pop %v777
    %v779 = vadd.f32 %v778, 1.0
    %v780 = vrcp.pop %v779
    %v781 = vmul.f32 1.0, %v780
    %v782 = vsel %vm48, %v775, %v781
    %v784 = vrot.slane %v711, 6
    %v786 = vmul.f32 %v782, %v784
    %788 = vrot.lane.b32.xlu0 %v782, 64
    %v789 = vpop.permute.xlu0 %788
    %v791 = vmul.f32 %v782, %v789
    %793 = vrot.lane.b32.xlu0 %v791, 32
    %v794 = vpop.permute.xlu0 %793
    %v796 = vadd.f32 %v786, %v794
    %v797 = vtanh.pop %v796
    %799 = vrot.lane.b32.xlu0 %v797, 64
    %v800 = vpop.permute.xlu0 %799
    %v802 = vmul.f32 %v782, %v800
    %804 = vrot.lane.b32.xlu0 %v802, 32
    %v805 = vpop.permute.xlu0 %804
    %807 = vst.msk [vmem:[#allocation2 + $0x8] sm:$0xc0] %vm470, %v805
    %808 = vst.msk [vmem:[#allocation3 - $0x6] sm:$0xc0] %vm470, %v805
    %810 = vrot.lane.b32.xlu0 %v796, 96
    %v811 = vpop.permute.xlu0 %810
    %813 = vst.msk [vmem:[#allocation5 - $0x6] sm:$0xc0] %vm470, %v811
    %v814 = vld [vmem:[%s6] sm:$0xf]
    %v815 = vld [vmem:[%s6 + $0x4] sm:$0xf]
    %v816 = vld [vmem:[%s6 + $0x8] sm:$0xf]
    %v817 = vld [vmem:[%s6 + $0xc] sm:$0xf]
    %v818 = vld [vmem:[%s7] sm:$0xf]
    %v819 = vld [vmem:[%s7 + $0x4] sm:$0xf]
    %v820 = vld [vmem:[%s7 + $0x8] sm:$0xf]
    %v821 = vld [vmem:[%s7 + $0xc] sm:$0xf]
    %v822 = vld [vmem:[%s8] sm:$0x1]
    %v823 = vld [vmem:[#allocation2] sm:$0xff]
    %v824 = vld [vmem:[#allocation2 + $0x8] sm:$0xff]
    %v825 = vpack.c.bf16 %v824, %v823
    %v827 = vlaneseq
    %v828 = vshrl.u32 %v827, 7
    %v829 = vsub.s32 0, %v828
    %v830 = vrot.slane %v822, %v829
    %v836 = vunpack.c.l.b16 %v814
    %v837 = vunpack.c.l.b16 %v815
    %v838 = vunpack.c.l.b16 %v816
    %v839 = vunpack.c.l.b16 %v817
    %v840 = vpack.c.b16 %v837, %v836
    %v841 = vpack.c.b16 %v839, %v838
    %v845 = vsel %vm135, %v825, 0
    %847 = vmatprep.subr.bf16.mxu0 0
    %848 = vmatpush1.bf16.msra.mxu0 0
    %849 = vmatprep.subr.bf16.mxu0 0
    %850 = vmatpush1.bf16.msra.mxu0 0
    %851 = vmatprep.subr.bf16.mxu0 0
    %852 = vmatpush1.bf16.msra.mxu0 0
    %853 = vmatprep.subr.bf16.mxu0 0
    %854 = vmatpush1.bf16.msra.mxu0 0
    %855 = vmatprep.subr.bf16.mxu0 0
    %856 = vmatpush1.bf16.msra.mxu0 0
    %857 = vmatprep.subr.bf16.mxu0 0
    %858 = vmatpush1.bf16.msra.mxu0 0
    %859 = vmatprep.subr.bf16.mxu0 0
    %860 = vmatpush1.bf16.msra.mxu0 %v841
    %861 = vmatprep.subr.bf16.mxu0 0
    %862 = vmatpush1.bf16.msra.mxu0 %v840
    %863 = vmatprep.subr.bf16.mxu0 0
    %864 = vmatpush2.bf16.msra.mxu0 0
    %865 = vmatprep.subr.bf16.mxu0 0
    %866 = vmatpush2.bf16.msra.mxu0 0
    %867 = vmatprep.subr.bf16.mxu0 0
    %868 = vmatpush2.bf16.msra.mxu0 0
    %869 = vmatprep.subr.bf16.mxu0 0
    %870 = vmatpush2.bf16.msra.mxu0 0
    %871 = vmatprep.subr.bf16.mxu0 0
    %872 = vmatpush2.bf16.msra.mxu0 0
    %873 = vmatprep.subr.bf16.mxu0 0
    %874 = vmatpush2.bf16.msra.mxu0 0
    %875 = vmatprep.subr.bf16.mxu0 0
    %876 = vmatpush2.bf16.msra.mxu0 0
    %877 = vmatprep.subr.bf16.mxu0 0
    %878 = vmatpush2.bf16.msra.mxu0 0
    %879 = vmatprep.mubr.bf16.mxu0 0
    %880 = vmatmul.mubr.bf16.gmra.mxu0 %v845
    %v881 = vpop.f32.mrf.mxu0
    %v882 = vadd.f32 %v830, %v881
    %v883 = vpop.f32.mrf.mxu0
    %v884 = vpop.f32.mrf.mxu0
    %v885 = vadd.f32 %v830, %v884
    %v886 = vpop.f32.mrf.mxu0
    %887 = vdwg.mxu0
    %s888 = scalar_lea.vmem %s1, 2
    %v889 = vld [vmem:[%s888] sm:$0x3]
    %s890 = scalar_lea.vmem %s2, 2
    %v891 = vld [vmem:[%s890] sm:$0x3]
    %v892 = vpack.c.bf16 %v889, %v889
    %v897 = vunpack.c.l.b16 %v818
    %v898 = vunpack.c.l.b16 %v819
    %v899 = vunpack.c.l.b16 %v820
    %v900 = vunpack.c.l.b16 %v821
    %v901 = vpack.c.b16 %v898, %v897
    %v902 = vpack.c.b16 %v900, %v899
    %v906 = vsel %vm135, %v892, 0
    %908 = vmatprep.subr.bf16.mxu0 0
    %909 = vmatpush1.bf16.msra.mxu0 0
    %910 = vmatprep.subr.bf16.mxu0 0
    %911 = vmatpush1.bf16.msra.mxu0 0
    %912 = vmatprep.subr.bf16.mxu0 0
    %913 = vmatpush1.bf16.msra.mxu0 0
    %914 = vmatprep.subr.bf16.mxu0 0
    %915 = vmatpush1.bf16.msra.mxu0 0
    %916 = vmatprep.subr.bf16.mxu0 0
    %917 = vmatpush1.bf16.msra.mxu0 0
    %918 = vmatprep.subr.bf16.mxu0 0
    %919 = vmatpush1.bf16.msra.mxu0 0
    %920 = vmatprep.subr.bf16.mxu0 0
    %921 = vmatpush1.bf16.msra.mxu0 %v902
    %922 = vmatprep.subr.bf16.mxu0 0
    %923 = vmatpush1.bf16.msra.mxu0 %v901
    %924 = vmatprep.subr.bf16.mxu0 0
    %925 = vmatpush2.bf16.msra.mxu0 0
    %926 = vmatprep.subr.bf16.mxu0 0
    %927 = vmatpush2.bf16.msra.mxu0 0
    %928 = vmatprep.subr.bf16.mxu0 0
    %929 = vmatpush2.bf16.msra.mxu0 0
    %930 = vmatprep.subr.bf16.mxu0 0
    %931 = vmatpush2.bf16.msra.mxu0 0
    %932 = vmatprep.subr.bf16.mxu0 0
    %933 = vmatpush2.bf16.msra.mxu0 0
    %934 = vmatprep.subr.bf16.mxu0 0
    %935 = vmatpush2.bf16.msra.mxu0 0
    %936 = vmatprep.subr.bf16.mxu0 0
    %937 = vmatpush2.bf16.msra.mxu0 0
    %938 = vmatprep.subr.bf16.mxu0 0
    %939 = vmatpush2.bf16.msra.mxu0 0
    %940 = vmatprep.mubr.bf16.mxu0 0
    %941 = vmatmul.mubr.bf16.gmra.mxu0 %v906
    %v942 = vpop.f32.mrf.mxu0
    %v943 = vadd.f32 0.0, %v942
    %v944 = vpop.f32.mrf.mxu0
    %v945 = vpop.f32.mrf.mxu0
    %v946 = vpop.f32.mrf.mxu0
    %947 = vdwg.mxu0
    %v948 = vadd.f32 %v882, %v943
    %v949 = vtanh.pop %v948
    %v950 = vxor.u32 %v948, 2147483648
    %v951 = vmul.f32 %v950, 1.442695
    %v952 = vpow.pop %v951
    %v953 = vadd.f32 %v952, 1.0
    %v954 = vrcp.pop %v953
    %v955 = vmul.f32 1.0, %v954
    %v956 = vsel %vm48, %v949, %v955
    %958 = vrot.lane.b32.xlu0 %v891, 32
    %v959 = vpop.permute.xlu0 %958
    %v961 = vmul.f32 %v956, %v959
    %963 = vrot.lane.b32.xlu0 %v956, 64
    %v964 = vpop.permute.xlu0 %963
    %v966 = vmul.f32 %v956, %v964
    %968 = vrot.lane.b32.xlu0 %v966, 32
    %v969 = vpop.permute.xlu0 %968
    %v971 = vadd.f32 %v961, %v969
    %v972 = vtanh.pop %v971
    %974 = vrot.lane.b32.xlu0 %v972, 64
    %v975 = vpop.permute.xlu0 %974
    %v977 = vmul.f32 %v956, %v975
    %979 = vrot.lane.b32.xlu0 %v977, 32
    %v980 = vpop.permute.xlu0 %979
    %982 = vst.msk [vmem:[#allocation2] sm:$0x3] %vm213, %v980
    %v983 = vpack.c.bf16 %v977, %v977
    %985 = vrot.lane.b32.xlu0 %v983, 32
    %v986 = vpop.permute.xlu0 %985
    %v988 = vsel %vm135, %v986, 0
    %990 = vmatprep.subr.bf16.mxu0 0
    %991 = vmatpush1.bf16.msra.mxu0 0
    %992 = vmatprep.subr.bf16.mxu0 0
    %993 = vmatpush1.bf16.msra.mxu0 0
    %994 = vmatprep.subr.bf16.mxu0 0
    %995 = vmatpush1.bf16.msra.mxu0 0
    %996 = vmatprep.subr.bf16.mxu0 0
    %997 = vmatpush1.bf16.msra.mxu0 0
    %998 = vmatprep.subr.bf16.mxu0 0
    %999 = vmatpush1.bf16.msra.mxu0 0
    %1000 = vmatprep.subr.bf16.mxu0 0
    %1001 = vmatpush1.bf16.msra.mxu0 0
    %1002 = vmatprep.subr.bf16.mxu0 0
    %1003 = vmatpush1.bf16.msra.mxu0 %v902
    %1004 = vmatprep.subr.bf16.mxu0 0
    %1005 = vmatpush1.bf16.msra.mxu0 %v901
    %1006 = vmatprep.subr.bf16.mxu0 0
    %1007 = vmatpush2.bf16.msra.mxu0 0
    %1008 = vmatprep.subr.bf16.mxu0 0
    %1009 = vmatpush2.bf16.msra.mxu0 0
    %1010 = vmatprep.subr.bf16.mxu0 0
    %1011 = vmatpush2.bf16.msra.mxu0 0
    %1012 = vmatprep.subr.bf16.mxu0 0
    %1013 = vmatpush2.bf16.msra.mxu0 0
    %1014 = vmatprep.subr.bf16.mxu0 0
    %1015 = vmatpush2.bf16.msra.mxu0 0
    %1016 = vmatprep.subr.bf16.mxu0 0
    %1017 = vmatpush2.bf16.msra.mxu0 0
    %1018 = vmatprep.subr.bf16.mxu0 0
    %1019 = vmatpush2.bf16.msra.mxu0 0
    %1020 = vmatprep.subr.bf16.mxu0 0
    %1021 = vmatpush2.bf16.msra.mxu0 0
    %1022 = vmatprep.mubr.bf16.mxu0 0
    %1023 = vmatmul.mubr.bf16.gmra.mxu0 %v988
    %v1024 = vpop.f32.mrf.mxu0
    %v1025 = vadd.f32 0.0, %v1024
    %v1026 = vpop.f32.mrf.mxu0
    %v1027 = vpop.f32.mrf.mxu0
    %v1028 = vpop.f32.mrf.mxu0
    %1029 = vdwg.mxu0
    %v1031 = vrot.slane %v1025, 6
    %v1033 = vadd.f32 %v882, %v1031
    %v1034 = vtanh.pop %v1033
    %v1035 = vxor.u32 %v1033, 2147483648
    %v1036 = vmul.f32 %v1035, 1.442695
    %v1037 = vpow.pop %v1036
    %v1038 = vadd.f32 %v1037, 1.0
    %v1039 = vrcp.pop %v1038
    %v1040 = vmul.f32 1.0, %v1039
    %v1041 = vsel %vm48, %v1034, %v1040
    %v1043 = vrot.slane %v971, 6
    %v1045 = vmul.f32 %v1041, %v1043
    %1047 = vrot.lane.b32.xlu0 %v1041, 64
    %v1048 = vpop.permute.xlu0 %1047
    %v1050 = vmul.f32 %v1041, %v1048
    %1052 = vrot.lane.b32.xlu0 %v1050, 32
    %v1053 = vpop.permute.xlu0 %1052
    %v1055 = vadd.f32 %v1045, %v1053
    %v1056 = vtanh.pop %v1055
    %1058 = vrot.lane.b32.xlu0 %v1056, 64
    %v1059 = vpop.permute.xlu0 %1058
    %v1061 = vmul.f32 %v1041, %v1059
    %1063 = vrot.lane.b32.xlu0 %v1061, 32
    %v1064 = vpop.permute.xlu0 %1063
    %1066 = vst.msk [vmem:[#allocation2] sm:$0xc] %vm298, %v1064
    %v1067 = vpack.c.bf16 %v1061, %v1061
    %v1069 = vrot.slane %v1067, 1
    %1070 = vrot.lane.b32.xlu0 %v1069, 32
    %v1071 = vpop.permute.xlu0 %1070
    %v1073 = vsel %vm135, %v1071, 0
    %1075 = vmatprep.subr.bf16.mxu0 0
    %1076 = vmatpush1.bf16.msra.mxu0 0
    %1077 = vmatprep.subr.bf16.mxu0 0
    %1078 = vmatpush1.bf16.msra.mxu0 0
    %1079 = vmatprep.subr.bf16.mxu0 0
    %1080 = vmatpush1.bf16.msra.mxu0 0
    %1081 = vmatprep.subr.bf16.mxu0 0
    %1082 = vmatpush1.bf16.msra.mxu0 0
    %1083 = vmatprep.subr.bf16.mxu0 0
    %1084 = vmatpush1.bf16.msra.mxu0 0
    %1085 = vmatprep.subr.bf16.mxu0 0
    %1086 = vmatpush1.bf16.msra.mxu0 0
    %1087 = vmatprep.subr.bf16.mxu0 0
    %1088 = vmatpush1.bf16.msra.mxu0 %v902
    %1089 = vmatprep.subr.bf16.mxu0 0
    %1090 = vmatpush1.bf16.msra.mxu0 %v901
    %1091 = vmatprep.subr.bf16.mxu0 0
    %1092 = vmatpush2.bf16.msra.mxu0 0
    %1093 = vmatprep.subr.bf16.mxu0 0
    %1094 = vmatpush2.bf16.msra.mxu0 0
    %1095 = vmatprep.subr.bf16.mxu0 0
    %1096 = vmatpush2.bf16.msra.mxu0 0
    %1097 = vmatprep.subr.bf16.mxu0 0
    %1098 = vmatpush2.bf16.msra.mxu0 0
    %1099 = vmatprep.subr.bf16.mxu0 0
    %1100 = vmatpush2.bf16.msra.mxu0 0
    %1101 = vmatprep.subr.bf16.mxu0 0
    %1102 = vmatpush2.bf16.msra.mxu0 0
    %1103 = vmatprep.subr.bf16.mxu0 0
    %1104 = vmatpush2.bf16.msra.mxu0 0
    %1105 = vmatprep.subr.bf16.mxu0 0
    %1106 = vmatpush2.bf16.msra.mxu0 0
    %1107 = vmatprep.mubr.bf16.mxu0 0
    %1108 = vmatmul.mubr.bf16.gmra.mxu0 %v1073
    %v1109 = vpop.f32.mrf.mxu0
    %v1110 = vadd.f32 0.0, %v1109
    %v1111 = vpop.f32.mrf.mxu0
    %v1112 = vpop.f32.mrf.mxu0
    %v1113 = vpop.f32.mrf.mxu0
    %1114 = vdwg.mxu0
    %v1116 = vrot.slane %v1110, 4
    %v1118 = vadd.f32 %v882, %v1116
    %v1119 = vtanh.pop %v1118
    %v1120 = vxor.u32 %v1118, 2147483648
    %v1121 = vmul.f32 %v1120, 1.442695
    %v1122 = vpow.pop %v1121
    %v1123 = vadd.f32 %v1122, 1.0
    %v1124 = vrcp.pop %v1123
    %v1125 = vmul.f32 1.0, %v1124
    %v1126 = vsel %vm48, %v1119, %v1125
    %v1128 = vrot.slane %v1055, 6
    %v1130 = vmul.f32 %v1126, %v1128
    %1132 = vrot.lane.b32.xlu0 %v1126, 64
    %v1133 = vpop.permute.xlu0 %1132
    %v1135 = vmul.f32 %v1126, %v1133
    %1137 = vrot.lane.b32.xlu0 %v1135, 32
    %v1138 = vpop.permute.xlu0 %1137
    %v1140 = vadd.f32 %v1130, %v1138
    %v1141 = vtanh.pop %v1140
    %1143 = vrot.lane.b32.xlu0 %v1141, 64
    %v1144 = vpop.permute.xlu0 %1143
    %v1146 = vmul.f32 %v1126, %v1144
    %1148 = vrot.lane.b32.xlu0 %v1146, 32
    %v1149 = vpop.permute.xlu0 %1148
    %1151 = vst.msk [vmem:[#allocation2] sm:$0x30] %vm384, %v1149
    %v1152 = vpack.c.bf16 %v1146, %v1146
    %v1154 = vrot.slane %v1152, 2
    %1155 = vrot.lane.b32.xlu0 %v1154, 32
    %v1156 = vpop.permute.xlu0 %1155
    %v1158 = vsel %vm135, %v1156, 0
    %1160 = vmatprep.subr.bf16.mxu0 0
    %1161 = vmatpush1.bf16.msra.mxu0 0
    %1162 = vmatprep.subr.bf16.mxu0 0
    %1163 = vmatpush1.bf16.msra.mxu0 0
    %1164 = vmatprep.subr.bf16.mxu0 0
    %1165 = vmatpush1.bf16.msra.mxu0 0
    %1166 = vmatprep.subr.bf16.mxu0 0
    %1167 = vmatpush1.bf16.msra.mxu0 0
    %1168 = vmatprep.subr.bf16.mxu0 0
    %1169 = vmatpush1.bf16.msra.mxu0 0
    %1170 = vmatprep.subr.bf16.mxu0 0
    %1171 = vmatpush1.bf16.msra.mxu0 0
    %1172 = vmatprep.subr.bf16.mxu0 0
    %1173 = vmatpush1.bf16.msra.mxu0 %v902
    %1174 = vmatprep.subr.bf16.mxu0 0
    %1175 = vmatpush1.bf16.msra.mxu0 %v901
    %1176 = vmatprep.subr.bf16.mxu0 0
    %1177 = vmatpush2.bf16.msra.mxu0 0
    %1178 = vmatprep.subr.bf16.mxu0 0
    %1179 = vmatpush2.bf16.msra.mxu0 0
    %1180 = vmatprep.subr.bf16.mxu0 0
    %1181 = vmatpush2.bf16.msra.mxu0 0
    %1182 = vmatprep.subr.bf16.mxu0 0
    %1183 = vmatpush2.bf16.msra.mxu0 0
    %1184 = vmatprep.subr.bf16.mxu0 0
    %1185 = vmatpush2.bf16.msra.mxu0 0
    %1186 = vmatprep.subr.bf16.mxu0 0
    %1187 = vmatpush2.bf16.msra.mxu0 0
    %1188 = vmatprep.subr.bf16.mxu0 0
    %1189 = vmatpush2.bf16.msra.mxu0 0
    %1190 = vmatprep.subr.bf16.mxu0 0
    %1191 = vmatpush2.bf16.msra.mxu0 0
    %1192 = vmatprep.mubr.bf16.mxu0 0
    %1193 = vmatmul.mubr.bf16.gmra.mxu0 %v1158
    %v1194 = vpop.f32.mrf.mxu0
    %v1195 = vadd.f32 0.0, %v1194
    %v1196 = vpop.f32.mrf.mxu0
    %v1197 = vpop.f32.mrf.mxu0
    %v1198 = vpop.f32.mrf.mxu0
    %1199 = vdwg.mxu0
    %v1201 = vrot.slane %v1195, 2
    %v1203 = vadd.f32 %v882, %v1201
    %v1204 = vtanh.pop %v1203
    %v1205 = vxor.u32 %v1203, 2147483648
    %v1206 = vmul.f32 %v1205, 1.442695
    %v1207 = vpow.pop %v1206
    %v1208 = vadd.f32 %v1207, 1.0
    %v1209 = vrcp.pop %v1208
    %v1210 = vmul.f32 1.0, %v1209
    %v1211 = vsel %vm48, %v1204, %v1210
    %v1213 = vrot.slane %v1140, 6
    %v1215 = vmul.f32 %v1211, %v1213
    %1217 = vrot.lane.b32.xlu0 %v1211, 64
    %v1218 = vpop.permute.xlu0 %1217
    %v1220 = vmul.f32 %v1211, %v1218
    %1222 = vrot.lane.b32.xlu0 %v1220, 32
    %v1223 = vpop.permute.xlu0 %1222
    %v1225 = vadd.f32 %v1215, %v1223
    %v1226 = vtanh.pop %v1225
    %1228 = vrot.lane.b32.xlu0 %v1226, 64
    %v1229 = vpop.permute.xlu0 %1228
    %v1231 = vmul.f32 %v1211, %v1229
    %1233 = vrot.lane.b32.xlu0 %v1231, 32
    %v1234 = vpop.permute.xlu0 %1233
    %1236 = vst.msk [vmem:[#allocation2] sm:$0xc0] %vm470, %v1234
    %v1237 = vpack.c.bf16 %v1231, %v1231
    %v1239 = vrot.slane %v1237, 3
    %1240 = vrot.lane.b32.xlu0 %v1239, 32
    %v1241 = vpop.permute.xlu0 %1240
    %v1243 = vsel %vm135, %v1241, 0
    %1245 = vmatprep.subr.bf16.mxu0 0
    %1246 = vmatpush1.bf16.msra.mxu0 0
    %1247 = vmatprep.subr.bf16.mxu0 0
    %1248 = vmatpush1.bf16.msra.mxu0 0
    %1249 = vmatprep.subr.bf16.mxu0 0
    %1250 = vmatpush1.bf16.msra.mxu0 0
    %1251 = vmatprep.subr.bf16.mxu0 0
    %1252 = vmatpush1.bf16.msra.mxu0 0
    %1253 = vmatprep.subr.bf16.mxu0 0
    %1254 = vmatpush1.bf16.msra.mxu0 0
    %1255 = vmatprep.subr.bf16.mxu0 0
    %1256 = vmatpush1.bf16.msra.mxu0 0
    %1257 = vmatprep.subr.bf16.mxu0 0
    %1258 = vmatpush1.bf16.msra.mxu0 %v902
    %1259 = vmatprep.subr.bf16.mxu0 0
    %1260 = vmatpush1.bf16.msra.mxu0 %v901
    %1261 = vmatprep.subr.bf16.mxu0 0
    %1262 = vmatpush2.bf16.msra.mxu0 0
    %1263 = vmatprep.subr.bf16.mxu0 0
    %1264 = vmatpush2.bf16.msra.mxu0 0
    %1265 = vmatprep.subr.bf16.mxu0 0
    %1266 = vmatpush2.bf16.msra.mxu0 0
    %1267 = vmatprep.subr.bf16.mxu0 0
    %1268 = vmatpush2.bf16.msra.mxu0 0
    %1269 = vmatprep.subr.bf16.mxu0 0
    %1270 = vmatpush2.bf16.msra.mxu0 0
    %1271 = vmatprep.subr.bf16.mxu0 0
    %1272 = vmatpush2.bf16.msra.mxu0 0
    %1273 = vmatprep.subr.bf16.mxu0 0
    %1274 = vmatpush2.bf16.msra.mxu0 0
    %1275 = vmatprep.subr.bf16.mxu0 0
    %1276 = vmatpush2.bf16.msra.mxu0 0
    %1277 = vmatprep.mubr.bf16.mxu0 0
    %1278 = vmatmul.mubr.bf16.gmra.mxu0 %v1243
    %v1279 = vpop.f32.mrf.mxu0
    %v1280 = vadd.f32 0.0, %v1279
    %v1281 = vpop.f32.mrf.mxu0
    %v1282 = vpop.f32.mrf.mxu0
    %v1283 = vpop.f32.mrf.mxu0
    %1284 = vdwg.mxu0
    %v1285 = vadd.f32 %v885, %v1280
    %v1286 = vtanh.pop %v1285
    %v1287 = vxor.u32 %v1285, 2147483648
    %v1288 = vmul.f32 %v1287, 1.442695
    %v1289 = vpow.pop %v1288
    %v1290 = vadd.f32 %v1289, 1.0
    %v1291 = vrcp.pop %v1290
    %v1292 = vmul.f32 1.0, %v1291
    %v1293 = vsel %vm48, %v1286, %v1292
    %v1295 = vrot.slane %v1225, 6
    %v1297 = vmul.f32 %v1293, %v1295
    %1299 = vrot.lane.b32.xlu0 %v1293, 64
    %v1300 = vpop.permute.xlu0 %1299
    %v1302 = vmul.f32 %v1293, %v1300
    %1304 = vrot.lane.b32.xlu0 %v1302, 32
    %v1305 = vpop.permute.xlu0 %1304
    %v1307 = vadd.f32 %v1297, %v1305
    %v1308 = vtanh.pop %v1307
    %1310 = vrot.lane.b32.xlu0 %v1308, 64
    %v1311 = vpop.permute.xlu0 %1310
    %v1313 = vmul.f32 %v1293, %v1311
    %1315 = vrot.lane.b32.xlu0 %v1313, 32
    %v1316 = vpop.permute.xlu0 %1315
    %1318 = vst.msk [vmem:[#allocation2 + $0x8] sm:$0x3] %vm213, %v1316
    %v1319 = vpack.c.bf16 %v1313, %v1313
    %1321 = vrot.lane.b32.xlu0 %v1319, 32
    %v1322 = vpop.permute.xlu0 %1321
    %v1324 = vsel %vm135, %v1322, 0
    %1326 = vmatprep.subr.bf16.mxu0 0
    %1327 = vmatpush1.bf16.msra.mxu0 0
    %1328 = vmatprep.subr.bf16.mxu0 0
    %1329 = vmatpush1.bf16.msra.mxu0 0
    %1330 = vmatprep.subr.bf16.mxu0 0
    %1331 = vmatpush1.bf16.msra.mxu0 0
    %1332 = vmatprep.subr.bf16.mxu0 0
    %1333 = vmatpush1.bf16.msra.mxu0 0
    %1334 = vmatprep.subr.bf16.mxu0 0
    %1335 = vmatpush1.bf16.msra.mxu0 0
    %1336 = vmatprep.subr.bf16.mxu0 0
    %1337 = vmatpush1.bf16.msra.mxu0 0
    %1338 = vmatprep.subr.bf16.mxu0 0
    %1339 = vmatpush1.bf16.msra.mxu0 %v902
    %1340 = vmatprep.subr.bf16.mxu0 0
    %1341 = vmatpush1.bf16.msra.mxu0 %v901
    %1342 = vmatprep.subr.bf16.mxu0 0
    %1343 = vmatpush2.bf16.msra.mxu0 0
    %1344 = vmatprep.subr.bf16.mxu0 0
    %1345 = vmatpush2.bf16.msra.mxu0 0
    %1346 = vmatprep.subr.bf16.mxu0 0
    %1347 = vmatpush2.bf16.msra.mxu0 0
    %1348 = vmatprep.subr.bf16.mxu0 0
    %1349 = vmatpush2.bf16.msra.mxu0 0
    %1350 = vmatprep.subr.bf16.mxu0 0
    %1351 = vmatpush2.bf16.msra.mxu0 0
    %1352 = vmatprep.subr.bf16.mxu0 0
    %1353 = vmatpush2.bf16.msra.mxu0 0
    %1354 = vmatprep.subr.bf16.mxu0 0
    %1355 = vmatpush2.bf16.msra.mxu0 0
    %1356 = vmatprep.subr.bf16.mxu0 0
    %1357 = vmatpush2.bf16.msra.mxu0 0
    %1358 = vmatprep.mubr.bf16.mxu0 0
    %1359 = vmatmul.mubr.bf16.gmra.mxu0 %v1324
    %v1360 = vpop.f32.mrf.mxu0
    %v1361 = vadd.f32 0.0, %v1360
    %v1362 = vpop.f32.mrf.mxu0
    %v1363 = vpop.f32.mrf.mxu0
    %v1364 = vpop.f32.mrf.mxu0
    %1365 = vdwg.mxu0
    %v1367 = vrot.slane %v1361, 6
    %v1369 = vadd.f32 %v885, %v1367
    %v1370 = vtanh.pop %v1369
    %v1371 = vxor.u32 %v1369, 2147483648
    %v1372 = vmul.f32 %v1371, 1.442695
    %v1373 = vpow.pop %v1372
    %v1374 = vadd.f32 %v1373, 1.0
    %v1375 = vrcp.pop %v1374
    %v1376 = vmul.f32 1.0, %v1375
    %v1377 = vsel %vm48, %v1370, %v1376
    %v1379 = vrot.slane %v1307, 6
    %v1381 = vmul.f32 %v1377, %v1379
    %1383 = vrot.lane.b32.xlu0 %v1377, 64
    %v1384 = vpop.permute.xlu0 %1383
    %v1386 = vmul.f32 %v1377, %v1384
    %1388 = vrot.lane.b32.xlu0 %v1386, 32
    %v1389 = vpop.permute.xlu0 %1388
    %v1391 = vadd.f32 %v1381, %v1389
    %v1392 = vtanh.pop %v1391
    %1394 = vrot.lane.b32.xlu0 %v1392, 64
    %v1395 = vpop.permute.xlu0 %1394
    %v1397 = vmul.f32 %v1377, %v1395
    %1399 = vrot.lane.b32.xlu0 %v1397, 32
    %v1400 = vpop.permute.xlu0 %1399
    %1402 = vst.msk [vmem:[#allocation2 + $0x8] sm:$0xc] %vm298, %v1400
    %v1403 = vpack.c.bf16 %v1397, %v1397
    %v1405 = vrot.slane %v1403, 1
    %1406 = vrot.lane.b32.xlu0 %v1405, 32
    %v1407 = vpop.permute.xlu0 %1406
    %v1409 = vsel %vm135, %v1407, 0
    %1411 = vmatprep.subr.bf16.mxu0 0
    %1412 = vmatpush1.bf16.msra.mxu0 0
    %1413 = vmatprep.subr.bf16.mxu0 0
    %1414 = vmatpush1.bf16.msra.mxu0 0
    %1415 = vmatprep.subr.bf16.mxu0 0
    %1416 = vmatpush1.bf16.msra.mxu0 0
    %1417 = vmatprep.subr.bf16.mxu0 0
    %1418 = vmatpush1.bf16.msra.mxu0 0
    %1419 = vmatprep.subr.bf16.mxu0 0
    %1420 = vmatpush1.bf16.msra.mxu0 0
    %1421 = vmatprep.subr.bf16.mxu0 0
    %1422 = vmatpush1.bf16.msra.mxu0 0
    %1423 = vmatprep.subr.bf16.mxu0 0
    %1424 = vmatpush1.bf16.msra.mxu0 %v902
    %1425 = vmatprep.subr.bf16.mxu0 0
    %1426 = vmatpush1.bf16.msra.mxu0 %v901
    %1427 = vmatprep.subr.bf16.mxu0 0
    %1428 = vmatpush2.bf16.msra.mxu0 0
    %1429 = vmatprep.subr.bf16.mxu0 0
    %1430 = vmatpush2.bf16.msra.mxu0 0
    %1431 = vmatprep.subr.bf16.mxu0 0
    %1432 = vmatpush2.bf16.msra.mxu0 0
    %1433 = vmatprep.subr.bf16.mxu0 0
    %1434 = vmatpush2.bf16.msra.mxu0 0
    %1435 = vmatprep.subr.bf16.mxu0 0
    %1436 = vmatpush2.bf16.msra.mxu0 0
    %1437 = vmatprep.subr.bf16.mxu0 0
    %1438 = vmatpush2.bf16.msra.mxu0 0
    %1439 = vmatprep.subr.bf16.mxu0 0
    %1440 = vmatpush2.bf16.msra.mxu0 0
    %1441 = vmatprep.subr.bf16.mxu0 0
    %1442 = vmatpush2.bf16.msra.mxu0 0
    %1443 = vmatprep.mubr.bf16.mxu0 0
    %1444 = vmatmul.mubr.bf16.gmra.mxu0 %v1409
    %v1445 = vpop.f32.mrf.mxu0
    %v1446 = vadd.f32 0.0, %v1445
    %v1447 = vpop.f32.mrf.mxu0
    %v1448 = vpop.f32.mrf.mxu0
    %v1449 = vpop.f32.mrf.mxu0
    %1450 = vdwg.mxu0
    %v1452 = vrot.slane %v1446, 4
    %v1454 = vadd.f32 %v885, %v1452
    %v1455 = vtanh.pop %v1454
    %v1456 = vxor.u32 %v1454, 2147483648
    %v1457 = vmul.f32 %v1456, 1.442695
    %v1458 = vpow.pop %v1457
    %v1459 = vadd.f32 %v1458, 1.0
    %v1460 = vrcp.pop %v1459
    %v1461 = vmul.f32 1.0, %v1460
    %v1462 = vsel %vm48, %v1455, %v1461
    %v1464 = vrot.slane %v1391, 6
    %v1466 = vmul.f32 %v1462, %v1464
    %1468 = vrot.lane.b32.xlu0 %v1462, 64
    %v1469 = vpop.permute.xlu0 %1468
    %v1471 = vmul.f32 %v1462, %v1469
    %1473 = vrot.lane.b32.xlu0 %v1471, 32
    %v1474 = vpop.permute.xlu0 %1473
    %v1476 = vadd.f32 %v1466, %v1474
    %v1477 = vtanh.pop %v1476
    %1479 = vrot.lane.b32.xlu0 %v1477, 64
    %v1480 = vpop.permute.xlu0 %1479
    %v1482 = vmul.f32 %v1462, %v1480
    %1484 = vrot.lane.b32.xlu0 %v1482, 32
    %v1485 = vpop.permute.xlu0 %1484
    %1487 = vst.msk [vmem:[#allocation2 + $0x8] sm:$0x30] %vm384, %v1485
    %v1488 = vpack.c.bf16 %v1482, %v1482
    %v1490 = vrot.slane %v1488, 2
    %1491 = vrot.lane.b32.xlu0 %v1490, 32
    %v1492 = vpop.permute.xlu0 %1491
    %v1494 = vsel %vm135, %v1492, 0
    %1496 = vmatprep.subr.bf16.mxu0 0
    %1497 = vmatpush1.bf16.msra.mxu0 0
    %1498 = vmatprep.subr.bf16.mxu0 0
    %1499 = vmatpush1.bf16.msra.mxu0 0
    %1500 = vmatprep.subr.bf16.mxu0 0
    %1501 = vmatpush1.bf16.msra.mxu0 0
    %1502 = vmatprep.subr.bf16.mxu0 0
    %1503 = vmatpush1.bf16.msra.mxu0 0
    %1504 = vmatprep.subr.bf16.mxu0 0
    %1505 = vmatpush1.bf16.msra.mxu0 0
    %1506 = vmatprep.subr.bf16.mxu0 0
    %1507 = vmatpush1.bf16.msra.mxu0 0
    %1508 = vmatprep.subr.bf16.mxu0 0
    %1509 = vmatpush1.bf16.msra.mxu0 %v902
    %1510 = vmatprep.subr.bf16.mxu0 0
    %1511 = vmatpush1.bf16.msra.mxu0 %v901
    %1512 = vmatprep.subr.bf16.mxu0 0
    %1513 = vmatpush2.bf16.msra.mxu0 0
    %1514 = vmatprep.subr.bf16.mxu0 0
    %1515 = vmatpush2.bf16.msra.mxu0 0
    %1516 = vmatprep.subr.bf16.mxu0 0
    %1517 = vmatpush2.bf16.msra.mxu0 0
    %1518 = vmatprep.subr.bf16.mxu0 0
    %1519 = vmatpush2.bf16.msra.mxu0 0
    %1520 = vmatprep.subr.bf16.mxu0 0
    %1521 = vmatpush2.bf16.msra.mxu0 0
    %1522 = vmatprep.subr.bf16.mxu0 0
    %1523 = vmatpush2.bf16.msra.mxu0 0
    %1524 = vmatprep.subr.bf16.mxu0 0
    %1525 = vmatpush2.bf16.msra.mxu0 0
    %1526 = vmatprep.subr.bf16.mxu0 0
    %1527 = vmatpush2.bf16.msra.mxu0 0
    %1528 = vmatprep.mubr.bf16.mxu0 0
    %1529 = vmatmul.mubr.bf16.gmra.mxu0 %v1494
    %v1530 = vpop.f32.mrf.mxu0
    %v1531 = vadd.f32 0.0, %v1530
    %v1532 = vpop.f32.mrf.mxu0
    %v1533 = vpop.f32.mrf.mxu0
    %v1534 = vpop.f32.mrf.mxu0
    %1535 = vdwg.mxu0
    %v1537 = vrot.slane %v1531, 2
    %v1539 = vadd.f32 %v885, %v1537
    %v1540 = vtanh.pop %v1539
    %v1541 = vxor.u32 %v1539, 2147483648
    %v1542 = vmul.f32 %v1541, 1.442695
    %v1543 = vpow.pop %v1542
    %v1544 = vadd.f32 %v1543, 1.0
    %v1545 = vrcp.pop %v1544
    %v1546 = vmul.f32 1.0, %v1545
    %v1547 = vsel %vm48, %v1540, %v1546
    %v1549 = vrot.slane %v1476, 6
    %v1551 = vmul.f32 %v1547, %v1549
    %1553 = vrot.lane.b32.xlu0 %v1547, 64
    %v1554 = vpop.permute.xlu0 %1553
    %v1556 = vmul.f32 %v1547, %v1554
    %1558 = vrot.lane.b32.xlu0 %v1556, 32
    %v1559 = vpop.permute.xlu0 %1558
    %v1561 = vadd.f32 %v1551, %v1559
    %v1562 = vtanh.pop %v1561
    %1564 = vrot.lane.b32.xlu0 %v1562, 64
    %v1565 = vpop.permute.xlu0 %1564
    %v1567 = vmul.f32 %v1547, %v1565
    %1569 = vrot.lane.b32.xlu0 %v1567, 32
    %v1570 = vpop.permute.xlu0 %1569
    %1572 = vst.msk [vmem:[#allocation2 + $0x8] sm:$0xc0] %vm470, %v1570
    %s1573 = scalar_lea.vmem [#allocation3], 2
    %1574 = vst.msk [vmem:[%s1573 - $0x6] sm:$0xc0] %vm470, %v1570
    %1576 = vrot.lane.b32.xlu0 %v1561, 96
    %v1577 = vpop.permute.xlu0 %1576
    %s1579 = scalar_lea.vmem [#allocation5], 2
    %1580 = vst.msk [vmem:[%s1579 - $0x6] sm:$0xc0] %vm470, %v1577
    %v1581 = vld [vmem:[#allocation2] sm:$0xff]
    %v1582 = vld [vmem:[#allocation2 + $0x8] sm:$0xff]
    %v1583 = vpack.c.bf16 %v1582, %v1581
    %v1584 = vld [vmem:[%s9] sm:$0xf]
    %v1585 = vld [vmem:[%s9 + $0x4] sm:$0xf]
    %v1586 = vld [vmem:[%s9 + $0x8] sm:$0xf]
    %v1587 = vld [vmem:[%s9 + $0xc] sm:$0xf]
    %v1588 = vld [vmem:[%s10] sm:$0x1]
    %v1590 = vlaneseq
    %v1591 = vshrl.u32 %v1590, 7
    %v1592 = vsub.s32 0, %v1591
    %v1593 = vrot.slane %v1588, %v1592
    %v1599 = vunpack.c.l.b16 %v1584
    %v1600 = vunpack.c.l.b16 %v1585
    %v1601 = vunpack.c.l.b16 %v1586
    %v1602 = vunpack.c.l.b16 %v1587
    %v1603 = vpack.c.b16 %v1600, %v1599
    %v1604 = vpack.c.b16 %v1602, %v1601
    %v1608 = vsel %vm135, %v1583, 0
    %1610 = vmatprep.subr.bf16.mxu0 0
    %1611 = vmatpush1.bf16.msra.mxu0 0
    %1612 = vmatprep.subr.bf16.mxu0 0
    %1613 = vmatpush1.bf16.msra.mxu0 0
    %1614 = vmatprep.subr.bf16.mxu0 0
    %1615 = vmatpush1.bf16.msra.mxu0 0
    %1616 = vmatprep.subr.bf16.mxu0 0
    %1617 = vmatpush1.bf16.msra.mxu0 0
    %1618 = vmatprep.subr.bf16.mxu0 0
    %1619 = vmatpush1.bf16.msra.mxu0 0
    %1620 = vmatprep.subr.bf16.mxu0 0
    %1621 = vmatpush1.bf16.msra.mxu0 0
    %1622 = vmatprep.subr.bf16.mxu0 0
    %1623 = vmatpush1.bf16.msra.mxu0 %v1604
    %1624 = vmatprep.subr.bf16.mxu0 0
    %1625 = vmatpush1.bf16.msra.mxu0 %v1603
    %1626 = vmatprep.subr.bf16.mxu0 0
    %1627 = vmatpush2.bf16.msra.mxu0 0
    %1628 = vmatprep.subr.bf16.mxu0 0
    %1629 = vmatpush2.bf16.msra.mxu0 0
    %1630 = vmatprep.subr.bf16.mxu0 0
    %1631 = vmatpush2.bf16.msra.mxu0 0
    %1632 = vmatprep.subr.bf16.mxu0 0
    %1633 = vmatpush2.bf16.msra.mxu0 0
    %1634 = vmatprep.subr.bf16.mxu0 0
    %1635 = vmatpush2.bf16.msra.mxu0 0
    %1636 = vmatprep.subr.bf16.mxu0 0
    %1637 = vmatpush2.bf16.msra.mxu0 0
    %1638 = vmatprep.subr.bf16.mxu0 0
    %1639 = vmatpush2.bf16.msra.mxu0 0
    %1640 = vmatprep.subr.bf16.mxu0 0
    %1641 = vmatpush2.bf16.msra.mxu0 0
    %1642 = vmatprep.mubr.bf16.mxu0 0
    %1643 = vmatmul.mubr.bf16.gmra.mxu0 %v1608
    %v1644 = vpop.f32.mrf.mxu0
    %v1645 = vadd.f32 %v1593, %v1644
    %v1646 = vpop.f32.mrf.mxu0
    %v1647 = vpop.f32.mrf.mxu0
    %v1648 = vadd.f32 %v1593, %v1647
    %v1649 = vpop.f32.mrf.mxu0
    %1650 = vdwg.mxu0
    %1651 = vst [vmem:[%s11] sm:$0xff] %v1645
    %1652 = vst [vmem:[%s11 + $0x8] sm:$0xff] %v1648
    // Predicated region
    $region46: #{decoder_forward.1} parent=1 // pred_check
      _
    $region47: #{decoder_forward.1} parent=1 // pred_check_branch
      %1654 = sbr.rel (0) target = $region49
    $region48: #{decoder_forward.1} parent=1 // pred_region
      _
    $region49: #{decoder_forward.1} parent=1 // pred_fallthru
      _
    // Predicated region
    $region50: #{decoder_forward.1} parent=1 // pred_check
      _
    $region51: #{decoder_forward.1} parent=1 // pred_check_branch
      %1656 = sbr.rel (0) target = $region53
    $region52: #{decoder_forward.1} parent=1 // pred_region
      %s1658 = ssub.s32 64, 64
      %1659 = vsyncadd [#allocation4], %s1658
      %s1660 = sshll.u32 [#allocation3], 4
      %s1661 = int_to_ptr.vmem [resolvable:$true] %s1660
      %1666 = dma.vmem_to_hbm [thread:$0]  %s1661, 64, %s12, [#allocation4], 32, 32, 2
    $region53: #{decoder_forward.1} parent=1 // pred_fallthru
      _
    // Predicated region
    $region54: #{decoder_forward.1} parent=1 // pred_check
      _
    $region55: #{decoder_forward.1} parent=1 // pred_check_branch
      %1668 = sbr.rel (0) target = $region57
    $region56: #{decoder_forward.1} parent=1 // pred_region
      %s1670 = ssub.s32 64, 64
      %1671 = vsyncadd [#allocation6], %s1670
      %s1672 = sshll.u32 [#allocation5], 4
      %s1673 = int_to_ptr.vmem [resolvable:$true] %s1672
      %1678 = dma.vmem_to_hbm [thread:$0]  %s1673, 64, %s13, [#allocation6], 32, 32, 2
    $region57: #{decoder_forward.1} parent=1 // pred_fallthru
      _
    // Predicated region
    $region58: #{decoder_forward.1} parent=1 // pred_check
      _
    $region59: #{decoder_forward.1} parent=1 // pred_check_branch
      %1680 = sbr.rel (0) target = $region61
    $region60: #{decoder_forward.1} parent=1 // pred_region
      _
    $region61: #{decoder_forward.1} parent=1 // pred_fallthru
      _
    // Predicated region
    $region62: #{decoder_forward.1} parent=1 // pred_check
      _
    $region63: #{decoder_forward.1} parent=1 // pred_check_branch
      %1682 = sbr.rel (0) target = $region65
    $region64: #{decoder_forward.1} parent=1 // pred_region
      %1683 = dma.done [#allocation4], 64
    $region65: #{decoder_forward.1} parent=1 // pred_fallthru
      _
    // Predicated region
    $region66: #{decoder_forward.1} parent=1 // pred_check
      _
    $region67: #{decoder_forward.1} parent=1 // pred_check_branch
      %1685 = sbr.rel (0) target = $region69
    $region68: #{decoder_forward.1} parent=1 // pred_region
      %1686 = dma.done [#allocation6], 64
    $region69: #{decoder_forward.1} parent=1 // pred_fallthru
      _
    %1687 = vsyncpa [#allocation4], 1
    %1688 = vsyncpa [#allocation6], 1

</llo_original>
